<compile_context>
chip_gen: v7x
topology: tpu7x:2x2x1
jax: 0.10.0
libtpu: 0.0.40
codegen_flags: <defaults>
</compile_context>

<pallas_src>
import functools

import jax
import jax.numpy as jnp
from jax import lax
from jax.experimental import pallas as pl
from jax.experimental.pallas import tpu as pltpu


def _round_up(n, m):
    return ((n + m - 1) // m) * m


def _gelu(x):
    # Exact (erf-based) GELU, matching torch.nn.GELU() default.
    return 0.5 * x * (1.0 + lax.erf(x * 0.7071067811865476))


def _ff_bank_kernel(x_ref,
                    w1_ref, b1_ref,                 # fused first layer (bf16 / f32)
                    wc2_ref, bc2_ref,               # classifier layer 2
                    ws2_ref, bs2_ref,               # syntax layer 2
                    wm2_ref, bm2_ref,               # semantics layer 2
                    wl2_ref, bl2_ref, wl3_ref, bl3_ref,  # long_range layers 2, 3
                    wg2_ref, bg2_ref,               # general layer 2
                    o_ref,
                    *, splits):
    # Static column boundaries of the fused first-layer activation.
    s_syn, s_sem, s_lr, s_gen, s_cls, s_end = splits

    x = x_ref[...].astype(jnp.bfloat16)             # (TM, Dp) bf16 for the MXU

    # --- fused first layer: one wide matmul for all five branches -----------
    # columns: [syntax | semantics | long_range(1) | general | classifier(1)]
    h1 = (jnp.dot(x, w1_ref[...], preferred_element_type=jnp.float32)
          + b1_ref[...])                            # (TM, H1) f32

    # --- specialization classifier: GELU -> Linear -> Softmax ---------------
    h_cls = _gelu(h1[:, s_cls:s_end]).astype(jnp.bfloat16)
    logits = (jnp.dot(h_cls, wc2_ref[...], preferred_element_type=jnp.float32)
              + bc2_ref[...])
    logits = logits - jnp.max(logits, axis=-1, keepdims=True)
    e = jnp.exp(logits)
    scores = e * pl.reciprocal(jnp.sum(e, axis=-1, keepdims=True), approx=True)

    # --- experts, accumulated incrementally (low peak VMEM / vreg pressure) -
    # 'syntax': ReLU -> Linear
    h_syn = jnp.maximum(h1[:, s_syn:s_sem], 0.0).astype(jnp.bfloat16)
    acc = (jnp.dot(h_syn, ws2_ref[...], preferred_element_type=jnp.float32)
           + bs2_ref[...]) * scores[:, 0:1]

    # 'semantics': GELU -> Linear
    h_sem = _gelu(h1[:, s_sem:s_lr]).astype(jnp.bfloat16)
    acc = acc + (jnp.dot(h_sem, wm2_ref[...], preferred_element_type=jnp.float32)
                 + bm2_ref[...]) * scores[:, 1:2]

    # 'long_range': GELU -> Linear -> GELU -> Linear
    h_lr1 = _gelu(h1[:, s_lr:s_gen]).astype(jnp.bfloat16)
    h_lr2 = _gelu(jnp.dot(h_lr1, wl2_ref[...], preferred_element_type=jnp.float32)
                  + bl2_ref[...]).astype(jnp.bfloat16)
    acc = acc + (jnp.dot(h_lr2, wl3_ref[...], preferred_element_type=jnp.float32)
                 + bl3_ref[...]) * scores[:, 2:3]

    # 'general': GELU -> Linear
    h_gen = _gelu(h1[:, s_gen:s_cls]).astype(jnp.bfloat16)
    acc = acc + (jnp.dot(h_gen, wg2_ref[...], preferred_element_type=jnp.float32)
                 + bg2_ref[...]) * scores[:, 3:4]

    o_ref[...] = acc.astype(o_ref.dtype)


def _vmem_limit_bytes():
    """Raise the scoped VMEM limit toward physical capacity (64 MiB fallback)."""
    try:
        cap = pltpu.get_tpu_info().vmem_capacity_bytes
        return min(int(cap * 0.9), 128 << 20)
    except Exception:
        return 64 << 20


def splat_specialized_ff_bank(x, params, *, tile_m=256, lane_pad=True):
    """x: [B, S, D] float32; params: flat tuple of 22 weight/bias arrays (f32)."""
    (wc1, bc1, wc2, bc2,
     ws1, bs1, ws2, bs2,
     wm1, bm1, wm2, bm2,
     wl1, bl1, wl2, bl2, wl3, bl3,
     wg1, bg1, wg2, bg2) = params

    B, S, D = x.shape
    N = B * S

    # --- token tiling: large tiles, padded token count ----------------------
    # (On v7x, pick tile_m so N // tm >= 2 * num_cores for megacore sharding.)
    tm = max(8, min(tile_m, _round_up(N, 8)))
    tm = _round_up(tm, 8)
    Np = _round_up(N, tm)

    # --- lane-dense model dim: pad D to a multiple of 128 -------------------
    Dp = _round_up(D, 128) if lane_pad else D

    def pad_rows(w, rows):
        return w if w.shape[0] == rows else jnp.pad(w, ((0, rows - w.shape[0]), (0, 0)))

    def pad_cols(a, cols):
        return a if a.shape[1] == cols else jnp.pad(a, ((0, 0), (0, cols - a.shape[1])))

    # Fused first layer: classifier slab last so all other boundaries are
    # multiples of D (lane-aligned when D % 128 == 0).
    w1 = jnp.concatenate([ws1, wm1, wl1, wg1, wc1], axis=1)     # (D, H1)
    b1 = jnp.concatenate([bs1, bm1, bl1, bg1, bc1], axis=1)     # (1, H1)
    w1 = pad_rows(w1, Dp).astype(jnp.bfloat16)

    # Static slice boundaries inside the fused activation.
    F2, F, F4, Fg, Dh = (ws1.shape[1], wm1.shape[1], wl1.shape[1],
                         wg1.shape[1], wc1.shape[1])
    s_syn = 0
    s_sem = s_syn + F2
    s_lr = s_sem + F
    s_gen = s_lr + F4
    s_cls = s_gen + Fg
    s_end = s_cls + Dh
    splits = (s_syn, s_sem, s_lr, s_gen, s_cls, s_end)

    # Second layers: bf16 weights, f32 biases; output-dim padded to Dp.
    wc2b, bc2b = wc2.astype(jnp.bfloat16), bc2
    ws2b, bs2b = pad_cols(ws2, Dp).astype(jnp.bfloat16), pad_cols(bs2, Dp)
    wm2b, bm2b = pad_cols(wm2, Dp).astype(jnp.bfloat16), pad_cols(bm2, Dp)
    wl2b, bl2b = wl2.astype(jnp.bfloat16), bl2
    wl3b, bl3b = pad_cols(wl3, Dp).astype(jnp.bfloat16), pad_cols(bl3, Dp)
    wg2b, bg2b = pad_cols(wg2, Dp).astype(jnp.bfloat16), pad_cols(bg2, Dp)

    # Tokens: flatten and pad rows (tokens) + lanes (features) with zeros.
    x2 = jnp.pad(x.reshape(N, D), ((0, Np - N), (0, Dp - D)))

    kernel_inputs = (x2, w1, b1, wc2b, bc2b, ws2b, bs2b, wm2b, bm2b,
                     wl2b, bl2b, wl3b, bl3b, wg2b, bg2b)

    def full_spec(arr):
        return pl.BlockSpec(arr.shape, lambda i: (0, 0))

    in_specs = [pl.BlockSpec((tm, Dp), lambda i: (i, 0))]
    in_specs += [full_spec(p) for p in kernel_inputs[1:]]

    out = pl.pallas_call(
        functools.partial(_ff_bank_kernel, splits=splits),
        out_shape=jax.ShapeDtypeStruct((Np, Dp), x.dtype),
        grid_spec=pltpu.PrefetchScalarGridSpec(
            num_scalar_prefetch=0,
            grid=(Np // tm,),
            in_specs=in_specs,
            out_specs=pl.BlockSpec((tm, Dp), lambda i: (i, 0)),
        ),
        compiler_params=pltpu.CompilerParams(
            dimension_semantics=("parallel",),
            vmem_limit_bytes=_vmem_limit_bytes()),
    )(*kernel_inputs)

    return out[:N, :D].reshape(B, S, D)


def init_params(key, model_dim, num_specializations=4, ff_dim=None):
    """Deterministic synthetic parameter init (shapes follow the nn.Module)."""
    D = model_dim
    F = ff_dim or 4 * D
    keys = jax.random.split(key, 2 * 11)
    kit = iter(keys)

    def linear(fan_in, fan_out):
        kw, kb = next(kit), next(kit)
        w = jax.random.normal(kw, (fan_in, fan_out), jnp.float32) / jnp.sqrt(fan_in)
        b = 0.01 * jax.random.normal(kb, (1, fan_out), jnp.float32)
        return w, b

    wc1, bc1 = linear(D, D // 2)                    # classifier layer 1
    wc2, bc2 = linear(D // 2, num_specializations)  # classifier layer 2
    ws1, bs1 = linear(D, F // 2)                    # syntax
    ws2, bs2 = linear(F // 2, D)
    wm1, bm1 = linear(D, F)                         # semantics
    wm2, bm2 = linear(F, D)
    wl1, bl1 = linear(D, F // 4)                    # long_range
    wl2, bl2 = linear(F // 4, F)
    wl3, bl3 = linear(F, D)
    wg1, bg1 = linear(D, F)                         # general
    wg2, bg2 = linear(F, D)

    return (wc1, bc1, wc2, bc2,
            ws1, bs1, ws2, bs2,
            wm1, bm1, wm2, bm2,
            wl1, bl1, wl2, bl2, wl3, bl3,
            wg1, bg1, wg2, bg2)


def _reference(x, params):
    """Pure-JAX f32 reference of the PyTorch forward (eval mode)."""
    (wc1, bc1, wc2, bc2,
     ws1, bs1, ws2, bs2,
     wm1, bm1, wm2, bm2,
     wl1, bl1, wl2, bl2, wl3, bl3,
     wg1, bg1, wg2, bg2) = params
    g = _gelu
    scores = jax.nn.softmax(g(x @ wc1 + bc1) @ wc2 + bc2, axis=-1)
    o_syn = jnp.maximum(x @ ws1 + bs1, 0.0) @ ws2 + bs2
    o_sem = g(x @ wm1 + bm1) @ wm2 + bm2
    o_lr = g(g(x @ wl1 + bl1) @ wl2 + bl2) @ wl3 + bl3
    o_gen = g(x @ wg1 + bg1) @ wg2 + bg2
    stacked = jnp.stack([o_syn, o_sem, o_lr, o_gen], axis=-1)   # [B,S,D,4]
    return (stacked * scores[..., None, :]).sum(-1)             # [B,S,D]


if __name__ == "__main__":
    key = jax.random.PRNGKey(0)
    kx, kp = jax.random.split(key)

    B, S, D = 2, 8, 32          # batch, seq, model_dim
    x = jax.random.normal(kx, (B, S, D), jnp.float32)
    params = init_params(kp, D, num_specializations=4)

    out = splat_specialized_ff_bank(x, params)
    out = jax.block_until_ready(out)

    ref = _reference(x, params)
    assert out.shape == (B, S, D)
    # Tolerance loosened vs. the f32 reference because matmul operands are
    # bf16 (f32 accumulation); see performance notes at top of file.
    max_err = float(jnp.max(jnp.abs(out - ref)))
    assert jnp.allclose(out, ref, atol=5e-2, rtol=5e-2), (
        f"mismatch vs reference, max abs err={max_err}")

    print("KERNEL_OK")
</pallas_src>

<mosaic_0001>
module attributes {stable_mosaic.version = 11 : i64} {
  func.func @_ff_bank_kernel(%arg0: i32, %arg1: memref<16x128xf32, #tpu.memory_space<vmem>>, %arg2: memref<128x368xbf16, #tpu.memory_space<vmem>>, %arg3: memref<1x368xf32, #tpu.memory_space<vmem>>, %arg4: memref<16x4xbf16, #tpu.memory_space<vmem>>, %arg5: memref<1x4xf32, #tpu.memory_space<vmem>>, %arg6: memref<64x128xbf16, #tpu.memory_space<vmem>>, %arg7: memref<1x128xf32, #tpu.memory_space<vmem>>, %arg8: memref<128x128xbf16, #tpu.memory_space<vmem>>, %arg9: memref<1x128xf32, #tpu.memory_space<vmem>>, %arg10: memref<32x128xbf16, #tpu.memory_space<vmem>>, %arg11: memref<1x128xf32, #tpu.memory_space<vmem>>, %arg12: memref<128x128xbf16, #tpu.memory_space<vmem>>, %arg13: memref<1x128xf32, #tpu.memory_space<vmem>>, %arg14: memref<128x128xbf16, #tpu.memory_space<vmem>>, %arg15: memref<1x128xf32, #tpu.memory_space<vmem>>, %arg16: memref<16x128xf32, #tpu.memory_space<vmem>>) attributes {dimension_semantics = [#tpu.dimension_semantics<parallel>], iteration_bounds = array<i64: 1>, scalar_prefetch = 0 : i64, scratch_operands = 0 : i64, tpu.core_type = #tpu.core_type<tc>, window_params = [{transform_indices = @transform_0, window_bounds = array<i64: 16, 128>}, {pipeline_mode = #tpu.pipeline_mode<synchronous>, transform_indices = @transform_1, window_bounds = array<i64: 128, 368>}, {pipeline_mode = #tpu.pipeline_mode<synchronous>, transform_indices = @transform_2, window_bounds = array<i64: 1, 368>}, {pipeline_mode = #tpu.pipeline_mode<synchronous>, transform_indices = @transform_3, window_bounds = array<i64: 16, 4>}, {pipeline_mode = #tpu.pipeline_mode<synchronous>, transform_indices = @transform_4, window_bounds = array<i64: 1, 4>}, {pipeline_mode = #tpu.pipeline_mode<synchronous>, transform_indices = @transform_5, window_bounds = array<i64: 64, 128>}, {pipeline_mode = #tpu.pipeline_mode<synchronous>, transform_indices = @transform_6, window_bounds = array<i64: 1, 128>}, {pipeline_mode = #tpu.pipeline_mode<synchronous>, transform_indices = @transform_7, window_bounds = array<i64: 128, 128>}, {pipeline_mode = #tpu.pipeline_mode<synchronous>, transform_indices = @transform_8, window_bounds = array<i64: 1, 128>}, {pipeline_mode = #tpu.pipeline_mode<synchronous>, transform_indices = @transform_9, window_bounds = array<i64: 32, 128>}, {pipeline_mode = #tpu.pipeline_mode<synchronous>, transform_indices = @transform_10, window_bounds = array<i64: 1, 128>}, {pipeline_mode = #tpu.pipeline_mode<synchronous>, transform_indices = @transform_11, window_bounds = array<i64: 128, 128>}, {pipeline_mode = #tpu.pipeline_mode<synchronous>, transform_indices = @transform_12, window_bounds = array<i64: 1, 128>}, {pipeline_mode = #tpu.pipeline_mode<synchronous>, transform_indices = @transform_13, window_bounds = array<i64: 128, 128>}, {pipeline_mode = #tpu.pipeline_mode<synchronous>, transform_indices = @transform_14, window_bounds = array<i64: 1, 128>}, {transform_indices = @transform_15, window_bounds = array<i64: 16, 128>}]} {
    %c0 = arith.constant 0 : index
    %c0_0 = arith.constant 0 : index
    %0 = vector.load %arg1[%c0, %c0_0] : memref<16x128xf32, #tpu.memory_space<vmem>>, vector<16x128xf32>
    %1 = arith.truncf %0 : vector<16x128xf32> to vector<16x128xbf16>
    %c0_1 = arith.constant 0 : index
    %c0_2 = arith.constant 0 : index
    %2 = vector.load %arg2[%c0_1, %c0_2] : memref<128x368xbf16, #tpu.memory_space<vmem>>, vector<128x368xbf16>
    %cst = arith.constant dense<0.000000e+00> : vector<16x368xf32>
    %3 = tpu.matmul %1, %2, %cst {dimension_numbers = #tpu.dot_dimension_numbers<[1], [0], [0], [1], [0, 0, 1, 1], [], []>} : vector<16x128xbf16>, vector<128x368xbf16>, vector<16x368xf32> -> vector<16x368xf32>
    %c0_3 = arith.constant 0 : index
    %c0_4 = arith.constant 0 : index
    %4 = vector.load %arg3[%c0_3, %c0_4] : memref<1x368xf32, #tpu.memory_space<vmem>>, vector<1x368xf32>
    %5 = vector.broadcast %4 : vector<1x368xf32> to vector<16x368xf32>
    %6 = arith.addf %3, %5 : vector<16x368xf32>
    %7 = vector.extract_strided_slice %6 {offsets = [0, 352], sizes = [16, 16], strides = [1, 1]} : vector<16x368xf32> to vector<16x16xf32>
    %cst_5 = arith.constant 5.000000e-01 : f32
    %8 = vector.broadcast %cst_5 : f32 to vector<16x16xf32>
    %9 = arith.mulf %8, %7 : vector<16x16xf32>
    %cst_6 = arith.constant 0.707106769 : f32
    %10 = vector.broadcast %cst_6 : f32 to vector<16x16xf32>
    %11 = arith.mulf %7, %10 : vector<16x16xf32>
    %12 = math.erf %11 : vector<16x16xf32>
    %cst_7 = arith.constant 1.000000e+00 : f32
    %13 = vector.broadcast %cst_7 : f32 to vector<16x16xf32>
    %14 = arith.addf %13, %12 : vector<16x16xf32>
    %15 = arith.mulf %9, %14 : vector<16x16xf32>
    %16 = arith.truncf %15 : vector<16x16xf32> to vector<16x16xbf16>
    %c0_8 = arith.constant 0 : index
    %c0_9 = arith.constant 0 : index
    %17 = vector.load %arg4[%c0_8, %c0_9] : memref<16x4xbf16, #tpu.memory_space<vmem>>, vector<16x4xbf16>
    %cst_10 = arith.constant dense<0.000000e+00> : vector<16x4xf32>
    %18 = tpu.matmul %16, %17, %cst_10 {dimension_numbers = #tpu.dot_dimension_numbers<[1], [0], [0], [1], [0, 0, 1, 1], [], []>} : vector<16x16xbf16>, vector<16x4xbf16>, vector<16x4xf32> -> vector<16x4xf32>
    %c0_11 = arith.constant 0 : index
    %c0_12 = arith.constant 0 : index
    %19 = vector.load %arg5[%c0_11, %c0_12] : memref<1x4xf32, #tpu.memory_space<vmem>>, vector<1x4xf32>
    %20 = vector.broadcast %19 : vector<1x4xf32> to vector<16x4xf32>
    %21 = arith.addf %18, %20 : vector<16x4xf32>
    %cst_13 = arith.constant dense<0xFF800000> : vector<16xf32>
    %22 = vector.multi_reduction <maximumf>, %21, %cst_13 [1] : vector<16x4xf32> to vector<16xf32>
    %23 = vector.shape_cast %22 : vector<16xf32> to vector<16x1xf32>
    %24 = vector.broadcast %23 : vector<16x1xf32> to vector<16x4xf32>
    %25 = arith.subf %21, %24 : vector<16x4xf32>
    %26 = math.exp %25 : vector<16x4xf32>
    %cst_14 = arith.constant dense<0.000000e+00> : vector<16xf32>
    %27 = vector.multi_reduction <add>, %26, %cst_14 [1] : vector<16x4xf32> to vector<16xf32>
    %28 = vector.shape_cast %27 : vector<16xf32> to vector<16x1xf32>
    %29 = tpu.reciprocal %28 {approx = true} : vector<16x1xf32> -> vector<16x1xf32>
    %30 = vector.broadcast %29 : vector<16x1xf32> to vector<16x4xf32>
    %31 = arith.mulf %26, %30 : vector<16x4xf32>
    %32 = vector.extract_strided_slice %6 {offsets = [0, 0], sizes = [16, 64], strides = [1, 1]} : vector<16x368xf32> to vector<16x64xf32>
    %cst_15 = arith.constant 0.000000e+00 : f32
    %33 = vector.broadcast %cst_15 : f32 to vector<16x64xf32>
    %34 = arith.maximumf %32, %33 : vector<16x64xf32>
    %35 = arith.truncf %34 : vector<16x64xf32> to vector<16x64xbf16>
    %c0_16 = arith.constant 0 : index
    %c0_17 = arith.constant 0 : index
    %36 = vector.load %arg6[%c0_16, %c0_17] : memref<64x128xbf16, #tpu.memory_space<vmem>>, vector<64x128xbf16>
    %cst_18 = arith.constant dense<0.000000e+00> : vector<16x128xf32>
    %37 = tpu.matmul %35, %36, %cst_18 {dimension_numbers = #tpu.dot_dimension_numbers<[1], [0], [0], [1], [0, 0, 1, 1], [], []>} : vector<16x64xbf16>, vector<64x128xbf16>, vector<16x128xf32> -> vector<16x128xf32>
    %c0_19 = arith.constant 0 : index
    %c0_20 = arith.constant 0 : index
    %38 = vector.load %arg7[%c0_19, %c0_20] : memref<1x128xf32, #tpu.memory_space<vmem>>, vector<1x128xf32>
    %39 = vector.broadcast %38 : vector<1x128xf32> to vector<16x128xf32>
    %40 = arith.addf %37, %39 : vector<16x128xf32>
    %41 = vector.extract_strided_slice %31 {offsets = [0, 0], sizes = [16, 1], strides = [1, 1]} : vector<16x4xf32> to vector<16x1xf32>
    %42 = vector.broadcast %41 : vector<16x1xf32> to vector<16x128xf32>
    %43 = arith.mulf %40, %42 : vector<16x128xf32>
    %44 = vector.extract_strided_slice %6 {offsets = [0, 64], sizes = [16, 128], strides = [1, 1]} : vector<16x368xf32> to vector<16x128xf32>
    %cst_21 = arith.constant 5.000000e-01 : f32
    %45 = vector.broadcast %cst_21 : f32 to vector<16x128xf32>
    %46 = arith.mulf %45, %44 : vector<16x128xf32>
    %cst_22 = arith.constant 0.707106769 : f32
    %47 = vector.broadcast %cst_22 : f32 to vector<16x128xf32>
    %48 = arith.mulf %44, %47 : vector<16x128xf32>
    %49 = math.erf %48 : vector<16x128xf32>
    %cst_23 = arith.constant 1.000000e+00 : f32
    %50 = vector.broadcast %cst_23 : f32 to vector<16x128xf32>
    %51 = arith.addf %50, %49 : vector<16x128xf32>
    %52 = arith.mulf %46, %51 : vector<16x128xf32>
    %53 = arith.truncf %52 : vector<16x128xf32> to vector<16x128xbf16>
    %c0_24 = arith.constant 0 : index
    %c0_25 = arith.constant 0 : index
    %54 = vector.load %arg8[%c0_24, %c0_25] : memref<128x128xbf16, #tpu.memory_space<vmem>>, vector<128x128xbf16>
    %cst_26 = arith.constant dense<0.000000e+00> : vector<16x128xf32>
    %55 = tpu.matmul %53, %54, %cst_26 {dimension_numbers = #tpu.dot_dimension_numbers<[1], [0], [0], [1], [0, 0, 1, 1], [], []>} : vector<16x128xbf16>, vector<128x128xbf16>, vector<16x128xf32> -> vector<16x128xf32>
    %c0_27 = arith.constant 0 : index
    %c0_28 = arith.constant 0 : index
    %56 = vector.load %arg9[%c0_27, %c0_28] : memref<1x128xf32, #tpu.memory_space<vmem>>, vector<1x128xf32>
    %57 = vector.broadcast %56 : vector<1x128xf32> to vector<16x128xf32>
    %58 = arith.addf %55, %57 : vector<16x128xf32>
    %59 = vector.extract_strided_slice %31 {offsets = [0, 1], sizes = [16, 1], strides = [1, 1]} : vector<16x4xf32> to vector<16x1xf32>
    %60 = vector.broadcast %59 : vector<16x1xf32> to vector<16x128xf32>
    %61 = arith.mulf %58, %60 : vector<16x128xf32>
    %62 = arith.addf %43, %61 : vector<16x128xf32>
    %63 = vector.extract_strided_slice %6 {offsets = [0, 192], sizes = [16, 32], strides = [1, 1]} : vector<16x368xf32> to vector<16x32xf32>
    %cst_29 = arith.constant 5.000000e-01 : f32
    %64 = vector.broadcast %cst_29 : f32 to vector<16x32xf32>
    %65 = arith.mulf %64, %63 : vector<16x32xf32>
    %cst_30 = arith.constant 0.707106769 : f32
    %66 = vector.broadcast %cst_30 : f32 to vector<16x32xf32>
    %67 = arith.mulf %63, %66 : vector<16x32xf32>
    %68 = math.erf %67 : vector<16x32xf32>
    %cst_31 = arith.constant 1.000000e+00 : f32
    %69 = vector.broadcast %cst_31 : f32 to vector<16x32xf32>
    %70 = arith.addf %69, %68 : vector<16x32xf32>
    %71 = arith.mulf %65, %70 : vector<16x32xf32>
    %72 = arith.truncf %71 : vector<16x32xf32> to vector<16x32xbf16>
    %c0_32 = arith.constant 0 : index
    %c0_33 = arith.constant 0 : index
    %73 = vector.load %arg10[%c0_32, %c0_33] : memref<32x128xbf16, #tpu.memory_space<vmem>>, vector<32x128xbf16>
    %cst_34 = arith.constant dense<0.000000e+00> : vector<16x128xf32>
    %74 = tpu.matmul %72, %73, %cst_34 {dimension_numbers = #tpu.dot_dimension_numbers<[1], [0], [0], [1], [0, 0, 1, 1], [], []>} : vector<16x32xbf16>, vector<32x128xbf16>, vector<16x128xf32> -> vector<16x128xf32>
    %c0_35 = arith.constant 0 : index
    %c0_36 = arith.constant 0 : index
    %75 = vector.load %arg11[%c0_35, %c0_36] : memref<1x128xf32, #tpu.memory_space<vmem>>, vector<1x128xf32>
    %76 = vector.broadcast %75 : vector<1x128xf32> to vector<16x128xf32>
    %77 = arith.addf %74, %76 : vector<16x128xf32>
    %cst_37 = arith.constant 5.000000e-01 : f32
    %78 = vector.broadcast %cst_37 : f32 to vector<16x128xf32>
    %79 = arith.mulf %78, %77 : vector<16x128xf32>
    %cst_38 = arith.constant 0.707106769 : f32
    %80 = vector.broadcast %cst_38 : f32 to vector<16x128xf32>
    %81 = arith.mulf %77, %80 : vector<16x128xf32>
    %82 = math.erf %81 : vector<16x128xf32>
    %cst_39 = arith.constant 1.000000e+00 : f32
    %83 = vector.broadcast %cst_39 : f32 to vector<16x128xf32>
    %84 = arith.addf %83, %82 : vector<16x128xf32>
    %85 = arith.mulf %79, %84 : vector<16x128xf32>
    %86 = arith.truncf %85 : vector<16x128xf32> to vector<16x128xbf16>
    %c0_40 = arith.constant 0 : index
    %c0_41 = arith.constant 0 : index
    %87 = vector.load %arg12[%c0_40, %c0_41] : memref<128x128xbf16, #tpu.memory_space<vmem>>, vector<128x128xbf16>
    %cst_42 = arith.constant dense<0.000000e+00> : vector<16x128xf32>
    %88 = tpu.matmul %86, %87, %cst_42 {dimension_numbers = #tpu.dot_dimension_numbers<[1], [0], [0], [1], [0, 0, 1, 1], [], []>} : vector<16x128xbf16>, vector<128x128xbf16>, vector<16x128xf32> -> vector<16x128xf32>
    %c0_43 = arith.constant 0 : index
    %c0_44 = arith.constant 0 : index
    %89 = vector.load %arg13[%c0_43, %c0_44] : memref<1x128xf32, #tpu.memory_space<vmem>>, vector<1x128xf32>
    %90 = vector.broadcast %89 : vector<1x128xf32> to vector<16x128xf32>
    %91 = arith.addf %88, %90 : vector<16x128xf32>
    %92 = vector.extract_strided_slice %31 {offsets = [0, 2], sizes = [16, 1], strides = [1, 1]} : vector<16x4xf32> to vector<16x1xf32>
    %93 = vector.broadcast %92 : vector<16x1xf32> to vector<16x128xf32>
    %94 = arith.mulf %91, %93 : vector<16x128xf32>
    %95 = arith.addf %62, %94 : vector<16x128xf32>
    %96 = vector.extract_strided_slice %6 {offsets = [0, 224], sizes = [16, 128], strides = [1, 1]} : vector<16x368xf32> to vector<16x128xf32>
    %cst_45 = arith.constant 5.000000e-01 : f32
    %97 = vector.broadcast %cst_45 : f32 to vector<16x128xf32>
    %98 = arith.mulf %97, %96 : vector<16x128xf32>
    %cst_46 = arith.constant 0.707106769 : f32
    %99 = vector.broadcast %cst_46 : f32 to vector<16x128xf32>
    %100 = arith.mulf %96, %99 : vector<16x128xf32>
    %101 = math.erf %100 : vector<16x128xf32>
    %cst_47 = arith.constant 1.000000e+00 : f32
    %102 = vector.broadcast %cst_47 : f32 to vector<16x128xf32>
    %103 = arith.addf %102, %101 : vector<16x128xf32>
    %104 = arith.mulf %98, %103 : vector<16x128xf32>
    %105 = arith.truncf %104 : vector<16x128xf32> to vector<16x128xbf16>
    %c0_48 = arith.constant 0 : index
    %c0_49 = arith.constant 0 : index
    %106 = vector.load %arg14[%c0_48, %c0_49] : memref<128x128xbf16, #tpu.memory_space<vmem>>, vector<128x128xbf16>
    %cst_50 = arith.constant dense<0.000000e+00> : vector<16x128xf32>
    %107 = tpu.matmul %105, %106, %cst_50 {dimension_numbers = #tpu.dot_dimension_numbers<[1], [0], [0], [1], [0, 0, 1, 1], [], []>} : vector<16x128xbf16>, vector<128x128xbf16>, vector<16x128xf32> -> vector<16x128xf32>
    %c0_51 = arith.constant 0 : index
    %c0_52 = arith.constant 0 : index
    %108 = vector.load %arg15[%c0_51, %c0_52] : memref<1x128xf32, #tpu.memory_space<vmem>>, vector<1x128xf32>
    %109 = vector.broadcast %108 : vector<1x128xf32> to vector<16x128xf32>
    %110 = arith.addf %107, %109 : vector<16x128xf32>
    %111 = vector.extract_strided_slice %31 {offsets = [0, 3], sizes = [16, 1], strides = [1, 1]} : vector<16x4xf32> to vector<16x1xf32>
    %112 = vector.broadcast %111 : vector<16x1xf32> to vector<16x128xf32>
    %113 = arith.mulf %110, %112 : vector<16x128xf32>
    %114 = arith.addf %95, %113 : vector<16x128xf32>
    %c0_53 = arith.constant 0 : index
    %c0_54 = arith.constant 0 : index
    %115 = vector.load %arg16[%c0_53, %c0_54] : memref<16x128xf32, #tpu.memory_space<vmem>>, vector<16x128xf32>
    tpu.vector_store %arg16[%c0_53, %c0_54], %114 {strides = array<i32>} : memref<16x128xf32, #tpu.memory_space<vmem>>, vector<16x128xf32>,
    return
  }
  func.func @transform_0(%arg0: i32) -> (i32, i32) {
    %c0_i32 = arith.constant 0 : i32
    %c0_i32_0 = arith.constant 0 : i32
    return %arg0, %c0_i32 : i32, i32
  }
  func.func @transform_1(%arg0: i32) -> (i32, i32) {
    %c0_i32 = arith.constant 0 : i32
    %c0_i32_0 = arith.constant 0 : i32
    %c0_i32_1 = arith.constant 0 : i32
    return %c0_i32, %c0_i32_0 : i32, i32
  }
  func.func @transform_2(%arg0: i32) -> (i32, i32) {
    %c0_i32 = arith.constant 0 : i32
    %c0_i32_0 = arith.constant 0 : i32
    %c0_i32_1 = arith.constant 0 : i32
    return %c0_i32, %c0_i32_0 : i32, i32
  }
  func.func @transform_3(%arg0: i32) -> (i32, i32) {
    %c0_i32 = arith.constant 0 : i32
    %c0_i32_0 = arith.constant 0 : i32
    %c0_i32_1 = arith.constant 0 : i32
    return %c0_i32, %c0_i32_0 : i32, i32
  }
  func.func @transform_4(%arg0: i32) -> (i32, i32) {
    %c0_i32 = arith.constant 0 : i32
    %c0_i32_0 = arith.constant 0 : i32
    %c0_i32_1 = arith.constant 0 : i32
    return %c0_i32, %c0_i32_0 : i32, i32
  }
  func.func @transform_5(%arg0: i32) -> (i32, i32) {
    %c0_i32 = arith.constant 0 : i32
    %c0_i32_0 = arith.constant 0 : i32
    %c0_i32_1 = arith.constant 0 : i32
    return %c0_i32, %c0_i32_0 : i32, i32
  }
  func.func @transform_6(%arg0: i32) -> (i32, i32) {
    %c0_i32 = arith.constant 0 : i32
    %c0_i32_0 = arith.constant 0 : i32
    %c0_i32_1 = arith.constant 0 : i32
    return %c0_i32, %c0_i32_0 : i32, i32
  }
  func.func @transform_7(%arg0: i32) -> (i32, i32) {
    %c0_i32 = arith.constant 0 : i32
    %c0_i32_0 = arith.constant 0 : i32
    %c0_i32_1 = arith.constant 0 : i32
    return %c0_i32, %c0_i32_0 : i32, i32
  }
  func.func @transform_8(%arg0: i32) -> (i32, i32) {
    %c0_i32 = arith.constant 0 : i32
    %c0_i32_0 = arith.constant 0 : i32
    %c0_i32_1 = arith.constant 0 : i32
    return %c0_i32, %c0_i32_0 : i32, i32
  }
  func.func @transform_9(%arg0: i32) -> (i32, i32) {
    %c0_i32 = arith.constant 0 : i32
    %c0_i32_0 = arith.constant 0 : i32
    %c0_i32_1 = arith.constant 0 : i32
    return %c0_i32, %c0_i32_0 : i32, i32
  }
  func.func @transform_10(%arg0: i32) -> (i32, i32) {
    %c0_i32 = arith.constant 0 : i32
    %c0_i32_0 = arith.constant 0 : i32
    %c0_i32_1 = arith.constant 0 : i32
    return %c0_i32, %c0_i32_0 : i32, i32
  }
  func.func @transform_11(%arg0: i32) -> (i32, i32) {
    %c0_i32 = arith.constant 0 : i32
    %c0_i32_0 = arith.constant 0 : i32
    %c0_i32_1 = arith.constant 0 : i32
    return %c0_i32, %c0_i32_0 : i32, i32
  }
  func.func @transform_12(%arg0: i32) -> (i32, i32) {
    %c0_i32 = arith.constant 0 : i32
    %c0_i32_0 = arith.constant 0 : i32
    %c0_i32_1 = arith.constant 0 : i32
    return %c0_i32, %c0_i32_0 : i32, i32
  }
  func.func @transform_13(%arg0: i32) -> (i32, i32) {
    %c0_i32 = arith.constant 0 : i32
    %c0_i32_0 = arith.constant 0 : i32
    %c0_i32_1 = arith.constant 0 : i32
    return %c0_i32, %c0_i32_0 : i32, i32
  }
  func.func @transform_14(%arg0: i32) -> (i32, i32) {
    %c0_i32 = arith.constant 0 : i32
    %c0_i32_0 = arith.constant 0 : i32
    %c0_i32_1 = arith.constant 0 : i32
    return %c0_i32, %c0_i32_0 : i32, i32
  }
  func.func @transform_15(%arg0: i32) -> (i32, i32) {
    %c0_i32 = arith.constant 0 : i32
    %c0_i32_0 = arith.constant 0 : i32
    return %arg0, %c0_i32 : i32, i32
  }
}

</mosaic_0001>

<llo_original>
// kernel: tpu_custom_call.1
$region0: #{tpu_custom_call.1}
  #allocation0 [shape = 'u32[]', space=smem, size = 0x4, offset = 0x4, fixed_abs, tag = 'smem constant byte address 0x4 - core index']
  #allocation1 [shape = 'u32[144,128]{1,0:T(1,128)}', space=vmem, size = 0x12000, scoped, tag = 'internal scratch']
  %s0 = inlined_call_operand.hbm [shape: f32[16,128], index: 0, kind: input, shape index: {}]
  %s1 = inlined_call_operand.hbm [shape: bf16[128,368], index: 1, kind: input, shape index: {}]
  %s2 = inlined_call_operand.hbm [shape: f32[1,368], index: 2, kind: input, shape index: {}]
  %s3 = inlined_call_operand.hbm [shape: bf16[16,4], index: 3, kind: input, shape index: {}]
  %s4 = inlined_call_operand.hbm [shape: f32[1,4], index: 4, kind: input, shape index: {}]
  %s5 = inlined_call_operand.hbm [shape: bf16[64,128], index: 5, kind: input, shape index: {}]
  %s6 = inlined_call_operand.hbm [shape: f32[1,128], index: 6, kind: input, shape index: {}]
  %s7 = inlined_call_operand.hbm [shape: bf16[128,128], index: 7, kind: input, shape index: {}]
  %s8 = inlined_call_operand.hbm [shape: f32[1,128], index: 8, kind: input, shape index: {}]
  %s9 = inlined_call_operand.hbm [shape: bf16[32,128], index: 9, kind: input, shape index: {}]
  %s10 = inlined_call_operand.hbm [shape: f32[1,128], index: 10, kind: input, shape index: {}]
  %s11 = inlined_call_operand.hbm [shape: bf16[128,128], index: 11, kind: input, shape index: {}]
  %s12 = inlined_call_operand.hbm [shape: f32[1,128], index: 12, kind: input, shape index: {}]
  %s13 = inlined_call_operand.hbm [shape: bf16[128,128], index: 13, kind: input, shape index: {}]
  %s14 = inlined_call_operand.hbm [shape: f32[1,128], index: 14, kind: input, shape index: {}]
  %s15 = inlined_call_operand.hbm [shape: f32[16,128], index: 15, kind: output, shape index: {}]
  %s16 = sld [smem:[#allocation0]]
  $region130: #{tpu_custom_call.1} parent=0
    _
  %s18 = ssub.s32 1, %s16
  %s19 = scalar_select 0, %s18, %s16
  $region1: #{tpu_custom_call.1} parent=0
    #allocation2 [shape = 'u8[8192]{0}', space=vmem, size = 0x2000, scoped, tag = 'input window, operand 0, single buffered']
    #allocation3 [shape = 's32[1]{0}', space=sflag, size = 0x4, scoped, tag = 'scoped memory for tpu_custom_call.1']
    #allocation4 [shape = 's32[1]{0}', space=sflag, size = 0x4, scoped, tag = 'scoped memory for tpu_custom_call.1']
    #allocation5 [shape = 'u8[98304]{0}', space=vmem, size = 0x18000, scoped, tag = 'input window, operand 1, single buffered']
    #allocation6 [shape = 's32[1]{0}', space=sflag, size = 0x4, scoped, tag = 'scoped memory for tpu_custom_call.1']
    #allocation7 [shape = 'u8[1536]{0}', space=vmem, size = 0x800, scoped, tag = 'input window, operand 2, single buffered']
    #allocation8 [shape = 'u8[4096]{0}', space=vmem, size = 0x1000, scoped, tag = 'input window, operand 3, single buffered']
    #allocation9 [shape = 's32[1]{0}', space=sflag, size = 0x4, scoped, tag = 'scoped memory for tpu_custom_call.1']
    #allocation10 [shape = 'u8[512]{0}', space=vmem, size = 0x400, scoped, tag = 'input window, operand 4, single buffered']
    #allocation11 [shape = 'u8[16384]{0}', space=vmem, size = 0x4000, scoped, tag = 'input window, operand 5, single buffered']
    #allocation12 [shape = 's32[1]{0}', space=sflag, size = 0x4, scoped, tag = 'scoped memory for tpu_custom_call.1']
    #allocation13 [shape = 'u8[512]{0}', space=vmem, size = 0x400, scoped, tag = 'input window, operand 6, single buffered']
    #allocation14 [shape = 'u8[32768]{0}', space=vmem, size = 0x8000, scoped, tag = 'input window, operand 7, single buffered']
    #allocation15 [shape = 's32[1]{0}', space=sflag, size = 0x4, scoped, tag = 'scoped memory for tpu_custom_call.1']
    #allocation16 [shape = 'u8[512]{0}', space=vmem, size = 0x400, scoped, tag = 'input window, operand 8, single buffered']
    #allocation17 [shape = 'u8[8192]{0}', space=vmem, size = 0x2000, scoped, tag = 'input window, operand 9, single buffered']
    #allocation18 [shape = 's32[1]{0}', space=sflag, size = 0x4, scoped, tag = 'scoped memory for tpu_custom_call.1']
    #allocation19 [shape = 'u8[512]{0}', space=vmem, size = 0x400, scoped, tag = 'input window, operand 10, single buffered']
    #allocation20 [shape = 'u8[32768]{0}', space=vmem, size = 0x8000, scoped, tag = 'input window, operand 11, single buffered']
    #allocation21 [shape = 's32[1]{0}', space=sflag, size = 0x4, scoped, tag = 'scoped memory for tpu_custom_call.1']
    #allocation22 [shape = 'u8[512]{0}', space=vmem, size = 0x400, scoped, tag = 'input window, operand 12, single buffered']
    #allocation23 [shape = 'u8[32768]{0}', space=vmem, size = 0x8000, scoped, tag = 'input window, operand 13, single buffered']
    #allocation24 [shape = 's32[1]{0}', space=sflag, size = 0x4, scoped, tag = 'scoped memory for tpu_custom_call.1']
    #allocation25 [shape = 'u8[512]{0}', space=vmem, size = 0x400, scoped, tag = 'input window, operand 14, single buffered']
    #allocation26 [shape = 'u8[8192]{0}', space=vmem, size = 0x2000, scoped, tag = 'output window, operand 0, single buffered']
    %20 = vsyncpa [#allocation3], 0
    %21 = vsyncpa [#allocation6], 0
    %22 = vsyncpa [#allocation9], 0
    %23 = vsyncpa [#allocation12], 0
    %24 = vsyncpa [#allocation15], 0
    %25 = vsyncpa [#allocation18], 0
    %26 = vsyncpa [#allocation21], 0
    %27 = vsyncpa [#allocation24], 0
    %28 = vsyncpa [#allocation4], 0
    // Predicated region
    $region2: #{tpu_custom_call.1} parent=1 // pred_check
      _
    $region3: #{tpu_custom_call.1} parent=1 // pred_check_branch
      %30 = sbr.rel (0) target = $region5
    $region4: #{tpu_custom_call.1} parent=1 // pred_region
      %s32 = ssub.s32 256, 256
      %33 = vsyncadd [#allocation3], %s32
      %s34 = sshll.u32 [#allocation2], 4
      %s35 = int_to_ptr.vmem [resolvable:$true] %s34
      %40 = dma.hbm_to_vmem [thread:$0]  %s0, 256, %s35, [#allocation3], 128, 128, 8
    $region5: #{tpu_custom_call.1} parent=1 // pred_fallthru
      _
    // Predicated region
    $region6: #{tpu_custom_call.1} parent=1 // pred_check
      _
    $region7: #{tpu_custom_call.1} parent=1 // pred_check_branch
      %42 = sbr.rel (0) target = $region9
    $region8: #{tpu_custom_call.1} parent=1 // pred_region
      %s44 = ssub.s32 3072, 3072
      %45 = vsyncadd [#allocation6], %s44
      %s46 = sshll.u32 [#allocation5], 4
      %s47 = int_to_ptr.vmem [resolvable:$true] %s46
      %52 = dma.hbm_to_vmem [thread:$0]  %s1, 3072, %s47, [#allocation6], 192, 192, 12
    $region9: #{tpu_custom_call.1} parent=1 // pred_fallthru
      _
    // Predicated region
    $region10: #{tpu_custom_call.1} parent=1 // pred_check
      _
    $region11: #{tpu_custom_call.1} parent=1 // pred_check_branch
      %54 = sbr.rel (0) target = $region13
    $region12: #{tpu_custom_call.1} parent=1 // pred_region
      %s56 = ssub.s32 48, 48
      %57 = vsyncadd [#allocation6], %s56
      %s59 = sshll.u32 [#allocation7], 4
      %s60 = int_to_ptr.vmem [resolvable:$true] %s59
      %62 = dma.hbm_to_vmem [thread:$0]  %s2, 48, %s60, [#allocation6]
    $region13: #{tpu_custom_call.1} parent=1 // pred_fallthru
      _
    // Predicated region
    $region14: #{tpu_custom_call.1} parent=1 // pred_check
      _
    $region15: #{tpu_custom_call.1} parent=1 // pred_check_branch
      %64 = sbr.rel (0) target = $region17
    $region16: #{tpu_custom_call.1} parent=1 // pred_region
      %s66 = ssub.s32 128, 128
      %67 = vsyncadd [#allocation9], %s66
      %s68 = sshll.u32 [#allocation8], 4
      %s69 = int_to_ptr.vmem [resolvable:$true] %s68
      %74 = dma.hbm_to_vmem [thread:$0]  %s3, 128, %s69, [#allocation9], 64, 64, 4
    $region17: #{tpu_custom_call.1} parent=1 // pred_fallthru
      _
    // Predicated region
    $region18: #{tpu_custom_call.1} parent=1 // pred_check
      _
    $region19: #{tpu_custom_call.1} parent=1 // pred_check_branch
      %76 = sbr.rel (0) target = $region21
    $region20: #{tpu_custom_call.1} parent=1 // pred_region
      %s78 = ssub.s32 16, 16
      %79 = vsyncadd [#allocation9], %s78
      %s81 = sshll.u32 [#allocation10], 4
      %s82 = int_to_ptr.vmem [resolvable:$true] %s81
      %84 = dma.hbm_to_vmem [thread:$0]  %s4, 16, %s82, [#allocation9]
    $region21: #{tpu_custom_call.1} parent=1 // pred_fallthru
      _
    // Predicated region
    $region22: #{tpu_custom_call.1} parent=1 // pred_check
      _
    $region23: #{tpu_custom_call.1} parent=1 // pred_check_branch
      %86 = sbr.rel (0) target = $region25
    $region24: #{tpu_custom_call.1} parent=1 // pred_region
      %s88 = ssub.s32 512, 512
      %89 = vsyncadd [#allocation12], %s88
      %s90 = sshll.u32 [#allocation11], 4
      %s91 = int_to_ptr.vmem [resolvable:$true] %s90
      %96 = dma.hbm_to_vmem [thread:$0]  %s5, 512, %s91, [#allocation12], 64, 64, 4
    $region25: #{tpu_custom_call.1} parent=1 // pred_fallthru
      _
    // Predicated region
    $region26: #{tpu_custom_call.1} parent=1 // pred_check
      _
    $region27: #{tpu_custom_call.1} parent=1 // pred_check_branch
      %98 = sbr.rel (0) target = $region29
    $region28: #{tpu_custom_call.1} parent=1 // pred_region
      %s100 = ssub.s32 16, 16
      %101 = vsyncadd [#allocation12], %s100
      %s103 = sshll.u32 [#allocation13], 4
      %s104 = int_to_ptr.vmem [resolvable:$true] %s103
      %106 = dma.hbm_to_vmem [thread:$0]  %s6, 16, %s104, [#allocation12]
    $region29: #{tpu_custom_call.1} parent=1 // pred_fallthru
      _
    // Predicated region
    $region30: #{tpu_custom_call.1} parent=1 // pred_check
      _
    $region31: #{tpu_custom_call.1} parent=1 // pred_check_branch
      %108 = sbr.rel (0) target = $region33
    $region32: #{tpu_custom_call.1} parent=1 // pred_region
      %s110 = ssub.s32 1024, 1024
      %111 = vsyncadd [#allocation15], %s110
      %s112 = sshll.u32 [#allocation14], 4
      %s113 = int_to_ptr.vmem [resolvable:$true] %s112
      %118 = dma.hbm_to_vmem [thread:$0]  %s7, 1024, %s113, [#allocation15], 64, 64, 4
    $region33: #{tpu_custom_call.1} parent=1 // pred_fallthru
      _
    // Predicated region
    $region34: #{tpu_custom_call.1} parent=1 // pred_check
      _
    $region35: #{tpu_custom_call.1} parent=1 // pred_check_branch
      %120 = sbr.rel (0) target = $region37
    $region36: #{tpu_custom_call.1} parent=1 // pred_region
      %s122 = ssub.s32 16, 16
      %123 = vsyncadd [#allocation15], %s122
      %s125 = sshll.u32 [#allocation16], 4
      %s126 = int_to_ptr.vmem [resolvable:$true] %s125
      %128 = dma.hbm_to_vmem [thread:$0]  %s8, 16, %s126, [#allocation15]
    $region37: #{tpu_custom_call.1} parent=1 // pred_fallthru
      _
    // Predicated region
    $region38: #{tpu_custom_call.1} parent=1 // pred_check
      _
    $region39: #{tpu_custom_call.1} parent=1 // pred_check_branch
      %130 = sbr.rel (0) target = $region41
    $region40: #{tpu_custom_call.1} parent=1 // pred_region
      %s132 = ssub.s32 256, 256
      %133 = vsyncadd [#allocation18], %s132
      %s134 = sshll.u32 [#allocation17], 4
      %s135 = int_to_ptr.vmem [resolvable:$true] %s134
      %140 = dma.hbm_to_vmem [thread:$0]  %s9, 256, %s135, [#allocation18], 64, 64, 4
    $region41: #{tpu_custom_call.1} parent=1 // pred_fallthru
      _
    // Predicated region
    $region42: #{tpu_custom_call.1} parent=1 // pred_check
      _
    $region43: #{tpu_custom_call.1} parent=1 // pred_check_branch
      %142 = sbr.rel (0) target = $region45
    $region44: #{tpu_custom_call.1} parent=1 // pred_region
      %s144 = ssub.s32 16, 16
      %145 = vsyncadd [#allocation18], %s144
      %s147 = sshll.u32 [#allocation19], 4
      %s148 = int_to_ptr.vmem [resolvable:$true] %s147
      %150 = dma.hbm_to_vmem [thread:$0]  %s10, 16, %s148, [#allocation18]
    $region45: #{tpu_custom_call.1} parent=1 // pred_fallthru
      _
    // Predicated region
    $region46: #{tpu_custom_call.1} parent=1 // pred_check
      _
    $region47: #{tpu_custom_call.1} parent=1 // pred_check_branch
      %152 = sbr.rel (0) target = $region49
    $region48: #{tpu_custom_call.1} parent=1 // pred_region
      %s154 = ssub.s32 1024, 1024
      %155 = vsyncadd [#allocation21], %s154
      %s156 = sshll.u32 [#allocation20], 4
      %s157 = int_to_ptr.vmem [resolvable:$true] %s156
      %162 = dma.hbm_to_vmem [thread:$0]  %s11, 1024, %s157, [#allocation21], 64, 64, 4
    $region49: #{tpu_custom_call.1} parent=1 // pred_fallthru
      _
    // Predicated region
    $region50: #{tpu_custom_call.1} parent=1 // pred_check
      _
    $region51: #{tpu_custom_call.1} parent=1 // pred_check_branch
      %164 = sbr.rel (0) target = $region53
    $region52: #{tpu_custom_call.1} parent=1 // pred_region
      %s166 = ssub.s32 16, 16
      %167 = vsyncadd [#allocation21], %s166
      %s169 = sshll.u32 [#allocation22], 4
      %s170 = int_to_ptr.vmem [resolvable:$true] %s169
      %172 = dma.hbm_to_vmem [thread:$0]  %s12, 16, %s170, [#allocation21]
    $region53: #{tpu_custom_call.1} parent=1 // pred_fallthru
      _
    // Predicated region
    $region54: #{tpu_custom_call.1} parent=1 // pred_check
      _
    $region55: #{tpu_custom_call.1} parent=1 // pred_check_branch
      %174 = sbr.rel (0) target = $region57
    $region56: #{tpu_custom_call.1} parent=1 // pred_region
      %s176 = ssub.s32 1024, 1024
      %177 = vsyncadd [#allocation24], %s176
      %s178 = sshll.u32 [#allocation23], 4
      %s179 = int_to_ptr.vmem [resolvable:$true] %s178
      %184 = dma.hbm_to_vmem [thread:$0]  %s13, 1024, %s179, [#allocation24], 64, 64, 4
    $region57: #{tpu_custom_call.1} parent=1 // pred_fallthru
      _
    // Predicated region
    $region58: #{tpu_custom_call.1} parent=1 // pred_check
      _
    $region59: #{tpu_custom_call.1} parent=1 // pred_check_branch
      %186 = sbr.rel (0) target = $region61
    $region60: #{tpu_custom_call.1} parent=1 // pred_region
      %s188 = ssub.s32 16, 16
      %189 = vsyncadd [#allocation24], %s188
      %s191 = sshll.u32 [#allocation25], 4
      %s192 = int_to_ptr.vmem [resolvable:$true] %s191
      %194 = dma.hbm_to_vmem [thread:$0]  %s14, 16, %s192, [#allocation24]
    $region61: #{tpu_custom_call.1} parent=1 // pred_fallthru
      _
    // Predicated region
    $region62: #{tpu_custom_call.1} parent=1 // pred_check
      _
    $region63: #{tpu_custom_call.1} parent=1 // pred_check_branch
      %196 = sbr.rel (0) target = $region65
    $region64: #{tpu_custom_call.1} parent=1 // pred_region
      %197 = dma.done [#allocation3], 256
    $region65: #{tpu_custom_call.1} parent=1 // pred_fallthru
      _
    // Predicated region
    $region66: #{tpu_custom_call.1} parent=1 // pred_check
      _
    $region67: #{tpu_custom_call.1} parent=1 // pred_check_branch
      %199 = sbr.rel (0) target = $region69
    $region68: #{tpu_custom_call.1} parent=1 // pred_region
      %200 = dma.done [#allocation6], 3072
    $region69: #{tpu_custom_call.1} parent=1 // pred_fallthru
      _
    // Predicated region
    $region70: #{tpu_custom_call.1} parent=1 // pred_check
      _
    $region71: #{tpu_custom_call.1} parent=1 // pred_check_branch
      %202 = sbr.rel (0) target = $region73
    $region72: #{tpu_custom_call.1} parent=1 // pred_region
      %203 = dma.done [#allocation6], 48
    $region73: #{tpu_custom_call.1} parent=1 // pred_fallthru
      _
    // Predicated region
    $region74: #{tpu_custom_call.1} parent=1 // pred_check
      _
    $region75: #{tpu_custom_call.1} parent=1 // pred_check_branch
      %205 = sbr.rel (0) target = $region77
    $region76: #{tpu_custom_call.1} parent=1 // pred_region
      %206 = dma.done [#allocation9], 128
    $region77: #{tpu_custom_call.1} parent=1 // pred_fallthru
      _
    // Predicated region
    $region78: #{tpu_custom_call.1} parent=1 // pred_check
      _
    $region79: #{tpu_custom_call.1} parent=1 // pred_check_branch
      %208 = sbr.rel (0) target = $region81
    $region80: #{tpu_custom_call.1} parent=1 // pred_region
      %209 = dma.done [#allocation9], 16
    $region81: #{tpu_custom_call.1} parent=1 // pred_fallthru
      _
    // Predicated region
    $region82: #{tpu_custom_call.1} parent=1 // pred_check
      _
    $region83: #{tpu_custom_call.1} parent=1 // pred_check_branch
      %211 = sbr.rel (0) target = $region85
    $region84: #{tpu_custom_call.1} parent=1 // pred_region
      %212 = dma.done [#allocation12], 512
    $region85: #{tpu_custom_call.1} parent=1 // pred_fallthru
      _
    // Predicated region
    $region86: #{tpu_custom_call.1} parent=1 // pred_check
      _
    $region87: #{tpu_custom_call.1} parent=1 // pred_check_branch
      %214 = sbr.rel (0) target = $region89
    $region88: #{tpu_custom_call.1} parent=1 // pred_region
      %215 = dma.done [#allocation12], 16
    $region89: #{tpu_custom_call.1} parent=1 // pred_fallthru
      _
    // Predicated region
    $region90: #{tpu_custom_call.1} parent=1 // pred_check
      _
    $region91: #{tpu_custom_call.1} parent=1 // pred_check_branch
      %217 = sbr.rel (0) target = $region93
    $region92: #{tpu_custom_call.1} parent=1 // pred_region
      %218 = dma.done [#allocation15], 1024
    $region93: #{tpu_custom_call.1} parent=1 // pred_fallthru
      _
    // Predicated region
    $region94: #{tpu_custom_call.1} parent=1 // pred_check
      _
    $region95: #{tpu_custom_call.1} parent=1 // pred_check_branch
      %220 = sbr.rel (0) target = $region97
    $region96: #{tpu_custom_call.1} parent=1 // pred_region
      %221 = dma.done [#allocation15], 16
    $region97: #{tpu_custom_call.1} parent=1 // pred_fallthru
      _
    // Predicated region
    $region98: #{tpu_custom_call.1} parent=1 // pred_check
      _
    $region99: #{tpu_custom_call.1} parent=1 // pred_check_branch
      %223 = sbr.rel (0) target = $region101
    $region100: #{tpu_custom_call.1} parent=1 // pred_region
      %224 = dma.done [#allocation18], 256
    $region101: #{tpu_custom_call.1} parent=1 // pred_fallthru
      _
    // Predicated region
    $region102: #{tpu_custom_call.1} parent=1 // pred_check
      _
    $region103: #{tpu_custom_call.1} parent=1 // pred_check_branch
      %226 = sbr.rel (0) target = $region105
    $region104: #{tpu_custom_call.1} parent=1 // pred_region
      %227 = dma.done [#allocation18], 16
    $region105: #{tpu_custom_call.1} parent=1 // pred_fallthru
      _
    // Predicated region
    $region106: #{tpu_custom_call.1} parent=1 // pred_check
      _
    $region107: #{tpu_custom_call.1} parent=1 // pred_check_branch
      %229 = sbr.rel (0) target = $region109
    $region108: #{tpu_custom_call.1} parent=1 // pred_region
      %230 = dma.done [#allocation21], 1024
    $region109: #{tpu_custom_call.1} parent=1 // pred_fallthru
      _
    // Predicated region
    $region110: #{tpu_custom_call.1} parent=1 // pred_check
      _
    $region111: #{tpu_custom_call.1} parent=1 // pred_check_branch
      %232 = sbr.rel (0) target = $region113
    $region112: #{tpu_custom_call.1} parent=1 // pred_region
      %233 = dma.done [#allocation21], 16
    $region113: #{tpu_custom_call.1} parent=1 // pred_fallthru
      _
    // Predicated region
    $region114: #{tpu_custom_call.1} parent=1 // pred_check
      _
    $region115: #{tpu_custom_call.1} parent=1 // pred_check_branch
      %235 = sbr.rel (0) target = $region117
    $region116: #{tpu_custom_call.1} parent=1 // pred_region
      %236 = dma.done [#allocation24], 1024
    $region117: #{tpu_custom_call.1} parent=1 // pred_fallthru
      _
    // Predicated region
    $region118: #{tpu_custom_call.1} parent=1 // pred_check
      _
    $region119: #{tpu_custom_call.1} parent=1 // pred_check_branch
      %238 = sbr.rel (0) target = $region121
    $region120: #{tpu_custom_call.1} parent=1 // pred_region
      %239 = dma.done [#allocation24], 16
    $region121: #{tpu_custom_call.1} parent=1 // pred_fallthru
      _
    %v241 = vld [vmem:[#allocation2] sm:$0xff]
    %v242 = vld [vmem:[#allocation2 + $0x8] sm:$0xff]
    %v243 = vpack.c.bf16 %v242, %v241
    %v244 = vld [vmem:[#allocation5] sm:$0xff]
    %v245 = vld [vmem:[#allocation5 + $0x8] sm:$0xf]
    %v246 = vld [vmem:[#allocation5 + $0xc] sm:$0xff]
    %v247 = vld [vmem:[#allocation5 + $0x14] sm:$0xf]
    %v248 = vld [vmem:[#allocation5 + $0x18] sm:$0xff]
    %v249 = vld [vmem:[#allocation5 + $0x20] sm:$0xf]
    %v250 = vld [vmem:[#allocation5 + $0x24] sm:$0xff]
    %v251 = vld [vmem:[#allocation5 + $0x2c] sm:$0xf]
    %v252 = vld [vmem:[#allocation5 + $0x30] sm:$0xff]
    %v253 = vld [vmem:[#allocation5 + $0x38] sm:$0xf]
    %v254 = vld [vmem:[#allocation5 + $0x3c] sm:$0xff]
    %v255 = vld [vmem:[#allocation5 + $0x44] sm:$0xf]
    %v256 = vld [vmem:[#allocation5 + $0x48] sm:$0xff]
    %v257 = vld [vmem:[#allocation5 + $0x50] sm:$0xf]
    %v258 = vld [vmem:[#allocation5 + $0x54] sm:$0xff]
    %v259 = vld [vmem:[#allocation5 + $0x5c] sm:$0xf]
    %v260 = vld [vmem:[#allocation5 + $0x60] sm:$0xff]
    %v261 = vld [vmem:[#allocation5 + $0x68] sm:$0xf]
    %v262 = vld [vmem:[#allocation5 + $0x6c] sm:$0xff]
    %v263 = vld [vmem:[#allocation5 + $0x74] sm:$0xf]
    %v264 = vld [vmem:[#allocation5 + $0x78] sm:$0xff]
    %v265 = vld [vmem:[#allocation5 + $0x80] sm:$0xf]
    %v266 = vld [vmem:[#allocation5 + $0x84] sm:$0xff]
    %v267 = vld [vmem:[#allocation5 + $0x8c] sm:$0xf]
    %v268 = vld [vmem:[#allocation5 + $0x90] sm:$0xff]
    %v269 = vld [vmem:[#allocation5 + $0x98] sm:$0xf]
    %v270 = vld [vmem:[#allocation5 + $0x9c] sm:$0xff]
    %v271 = vld [vmem:[#allocation5 + $0xa4] sm:$0xf]
    %v272 = vld [vmem:[#allocation5 + $0xa8] sm:$0xff]
    %v273 = vld [vmem:[#allocation5 + $0xb0] sm:$0xf]
    %v274 = vld [vmem:[#allocation5 + $0xb4] sm:$0xff]
    %v275 = vld [vmem:[#allocation5 + $0xbc] sm:$0xf]
    %v276 = vld [vmem:[#allocation7] sm:$0x7]
    %v278 = vlaneseq
    %v279 = vshrl.u32 %v278, 7
    %v280 = vsub.s32 0, %v279
    %v281 = vrot.slane %v276, %v280
    %v282 = vlaneseq
    %v283 = vshrl.u32 %v282, 7
    %v284 = vsub.s32 1, %v283
    %v285 = vrot.slane %v276, %v284
    %v286 = vlaneseq
    %v287 = vshrl.u32 %v286, 7
    %v288 = vsub.s32 2, %v287
    %v289 = vrot.slane %v276, %v288
    %v325 = vunpack.c.l.b16 %v244
    %v326 = vunpack.c.h.b16 %v244
    %v327 = vunpack.c.l.b16 %v245
    %v328 = vunpack.c.l.b16 %v246
    %v329 = vunpack.c.h.b16 %v246
    %v330 = vunpack.c.l.b16 %v247
    %v331 = vunpack.c.l.b16 %v248
    %v332 = vunpack.c.h.b16 %v248
    %v333 = vunpack.c.l.b16 %v249
    %v334 = vunpack.c.l.b16 %v250
    %v335 = vunpack.c.h.b16 %v250
    %v336 = vunpack.c.l.b16 %v251
    %v337 = vunpack.c.l.b16 %v252
    %v338 = vunpack.c.h.b16 %v252
    %v339 = vunpack.c.l.b16 %v253
    %v340 = vunpack.c.l.b16 %v254
    %v341 = vunpack.c.h.b16 %v254
    %v342 = vunpack.c.l.b16 %v255
    %v343 = vunpack.c.l.b16 %v256
    %v344 = vunpack.c.h.b16 %v256
    %v345 = vunpack.c.l.b16 %v257
    %v346 = vunpack.c.l.b16 %v258
    %v347 = vunpack.c.h.b16 %v258
    %v348 = vunpack.c.l.b16 %v259
    %v349 = vunpack.c.l.b16 %v260
    %v350 = vunpack.c.h.b16 %v260
    %v351 = vunpack.c.l.b16 %v261
    %v352 = vunpack.c.l.b16 %v262
    %v353 = vunpack.c.h.b16 %v262
    %v354 = vunpack.c.l.b16 %v263
    %v355 = vunpack.c.l.b16 %v264
    %v356 = vunpack.c.h.b16 %v264
    %v357 = vunpack.c.l.b16 %v265
    %v358 = vunpack.c.l.b16 %v266
    %v359 = vunpack.c.h.b16 %v266
    %v360 = vunpack.c.l.b16 %v267
    %v361 = vunpack.c.l.b16 %v268
    %v362 = vunpack.c.h.b16 %v268
    %v363 = vunpack.c.l.b16 %v269
    %v364 = vunpack.c.l.b16 %v270
    %v365 = vunpack.c.h.b16 %v270
    %v366 = vunpack.c.l.b16 %v271
    %v367 = vunpack.c.l.b16 %v272
    %v368 = vunpack.c.h.b16 %v272
    %v369 = vunpack.c.l.b16 %v273
    %v370 = vunpack.c.l.b16 %v274
    %v371 = vunpack.c.h.b16 %v274
    %v372 = vunpack.c.l.b16 %v275
    %v373 = vpack.c.b16 %v328, %v325
    %v374 = vpack.c.b16 %v329, %v326
    %v375 = vpack.c.b16 %v330, %v327
    %v376 = vpack.c.b16 %v334, %v331
    %v377 = vpack.c.b16 %v335, %v332
    %v378 = vpack.c.b16 %v336, %v333
    %v379 = vpack.c.b16 %v340, %v337
    %v380 = vpack.c.b16 %v341, %v338
    %v381 = vpack.c.b16 %v342, %v339
    %v382 = vpack.c.b16 %v346, %v343
    %v383 = vpack.c.b16 %v347, %v344
    %v384 = vpack.c.b16 %v348, %v345
    %v385 = vpack.c.b16 %v352, %v349
    %v386 = vpack.c.b16 %v353, %v350
    %v387 = vpack.c.b16 %v354, %v351
    %v388 = vpack.c.b16 %v358, %v355
    %v389 = vpack.c.b16 %v359, %v356
    %v390 = vpack.c.b16 %v360, %v357
    %v391 = vpack.c.b16 %v364, %v361
    %v392 = vpack.c.b16 %v365, %v362
    %v393 = vpack.c.b16 %v366, %v363
    %v394 = vpack.c.b16 %v370, %v367
    %v395 = vpack.c.b16 %v371, %v368
    %v396 = vpack.c.b16 %v372, %v369
    %421 = vmatprep.subr.bf16.mxu0 %v374
    %422 = vmatpush1.bf16.msra.mxu0 %v373
    %423 = vmatprep.subr.bf16.mxu0 %v377
    %424 = vmatpush1.bf16.msra.mxu0 %v376
    %425 = vmatprep.subr.bf16.mxu0 %v380
    %426 = vmatpush1.bf16.msra.mxu0 %v379
    %427 = vmatprep.subr.bf16.mxu0 %v383
    %428 = vmatpush1.bf16.msra.mxu0 %v382
    %429 = vmatprep.subr.bf16.mxu0 %v386
    %430 = vmatpush1.bf16.msra.mxu0 %v385
    %431 = vmatprep.subr.bf16.mxu0 %v389
    %432 = vmatpush1.bf16.msra.mxu0 %v388
    %433 = vmatprep.subr.bf16.mxu0 %v392
    %434 = vmatpush1.bf16.msra.mxu0 %v391
    %435 = vmatprep.subr.bf16.mxu0 %v395
    %436 = vmatpush1.bf16.msra.mxu0 %v394
    %437 = vmatprep.subr.bf16.mxu0 0
    %438 = vmatpush1.bf16.msra.mxu0 0
    %439 = vmatprep.subr.bf16.mxu0 0
    %440 = vmatpush1.bf16.msra.mxu0 0
    %441 = vmatprep.subr.bf16.mxu0 0
    %442 = vmatpush1.bf16.msra.mxu0 0
    %443 = vmatprep.subr.bf16.mxu0 0
    %444 = vmatpush1.bf16.msra.mxu0 0
    %445 = vmatprep.subr.bf16.mxu0 0
    %446 = vmatpush1.bf16.msra.mxu0 0
    %447 = vmatprep.subr.bf16.mxu0 0
    %448 = vmatpush1.bf16.msra.mxu0 0
    %449 = vmatprep.subr.bf16.mxu0 0
    %450 = vmatpush1.bf16.msra.mxu0 0
    %451 = vmatprep.subr.bf16.mxu0 0
    %452 = vmatpush1.bf16.msra.mxu0 0
    %453 = vmatprep.mubr.bf16.mxu0 0
    %454 = vmatmul.mubr.bf16.gmra.mrb[0].mxu0 %v243
    %v455 = vpop.f32.mrb[0].mxu0
    %v456 = vadd.f32 %v281, %v455
    %v457 = vpop.f32.mrb[0].mxu0
    %v458 = vadd.f32 %v285, %v457
    %v459 = vpop.f32.mrb[0].mxu0
    %v460 = vadd.f32 %v281, %v459
    %v461 = vpop.f32.mrb[0].mxu0
    %v462 = vadd.f32 %v285, %v461
    %463 = vdwg.mxu0
    %464 = vmatprep.subr.bf16.mxu0 0
    %465 = vmatpush1.bf16.msra.mxu0 %v375
    %466 = vmatprep.subr.bf16.mxu0 0
    %467 = vmatpush1.bf16.msra.mxu0 %v378
    %468 = vmatprep.subr.bf16.mxu0 0
    %469 = vmatpush1.bf16.msra.mxu0 %v381
    %470 = vmatprep.subr.bf16.mxu0 0
    %471 = vmatpush1.bf16.msra.mxu0 %v384
    %472 = vmatprep.subr.bf16.mxu0 0
    %473 = vmatpush1.bf16.msra.mxu0 %v387
    %474 = vmatprep.subr.bf16.mxu0 0
    %475 = vmatpush1.bf16.msra.mxu0 %v390
    %476 = vmatprep.subr.bf16.mxu0 0
    %477 = vmatpush1.bf16.msra.mxu0 %v393
    %478 = vmatprep.subr.bf16.mxu0 0
    %479 = vmatpush1.bf16.msra.mxu0 %v396
    %480 = vmatprep.subr.bf16.mxu0 0
    %481 = vmatpush1.bf16.msra.mxu0 0
    %482 = vmatprep.subr.bf16.mxu0 0
    %483 = vmatpush1.bf16.msra.mxu0 0
    %484 = vmatprep.subr.bf16.mxu0 0
    %485 = vmatpush1.bf16.msra.mxu0 0
    %486 = vmatprep.subr.bf16.mxu0 0
    %487 = vmatpush1.bf16.msra.mxu0 0
    %488 = vmatprep.subr.bf16.mxu0 0
    %489 = vmatpush1.bf16.msra.mxu0 0
    %490 = vmatprep.subr.bf16.mxu0 0
    %491 = vmatpush1.bf16.msra.mxu0 0
    %492 = vmatprep.subr.bf16.mxu0 0
    %493 = vmatpush1.bf16.msra.mxu0 0
    %494 = vmatprep.subr.bf16.mxu0 0
    %495 = vmatpush1.bf16.msra.mxu0 0
    %496 = vmatprep.mubr.bf16.mxu0 0
    %497 = vmatmul.mubr.bf16.gmra.mrb[0].mxu0 %v243
    %v498 = vpop.f32.mrb[0].mxu0
    %v499 = vadd.f32 %v289, %v498
    %v500 = vpop.f32.mrb[0].mxu0
    %v501 = vpop.f32.mrb[0].mxu0
    %v502 = vadd.f32 %v289, %v501
    %v503 = vpop.f32.mrb[0].mxu0
    %504 = vdwg.mxu0
    %v505 = vmul.f32 %v499, 0.5
    %v506 = vmul.f32 %v502, 0.5
    %v507 = vmul.f32 %v499, 0.70710677
    %v508 = vmul.f32 %v502, 0.70710677
    %v509 = verf.f32.pop %v507
    %v510 = verf.f32.pop %v508
    %v511 = vadd.f32 %v509, 1.0
    %v512 = vadd.f32 %v510, 1.0
    %v513 = vmul.f32 %v505, %v511
    %v514 = vmul.f32 %v506, %v512
    %v515 = vpack.c.bf16 %v514, %v513
    %v516 = vld [vmem:[#allocation8] sm:$0xf]
    %v517 = vld [vmem:[#allocation8 + $0x4] sm:$0xf]
    %v518 = vld [vmem:[#allocation10] sm:$0x1]
    %v520 = vlaneseq
    %v521 = vshrl.u32 %v520, 7
    %v522 = vsub.s32 0, %v521
    %v523 = vrot.slane %v518, %v522
    %526 = vrot.lane.b32.xlu0 %v515, 32
    %v527 = vpop.permute.xlu0 %526
    %v530 = vunpack.c.l.b16 %v516
    %v531 = vunpack.c.l.b16 %v517
    %v532 = vpack.c.b16 %v531, %v530
    %vm534 = vcmask 130048
    %v536 = vsel %vm534, %v527, 0
    %538 = vmatprep.subr.bf16.mxu0 0
    %539 = vmatpush1.bf16.msra.mxu0 %v532
    %540 = vmatprep.subr.bf16.mxu0 0
    %541 = vmatpush1.bf16.msra.mxu0 0
    %542 = vmatprep.subr.bf16.mxu0 0
    %543 = vmatpush1.bf16.msra.mxu0 0
    %544 = vmatprep.subr.bf16.mxu0 0
    %545 = vmatpush1.bf16.msra.mxu0 0
    %546 = vmatprep.subr.bf16.mxu0 0
    %547 = vmatpush1.bf16.msra.mxu0 0
    %548 = vmatprep.subr.bf16.mxu0 0
    %549 = vmatpush1.bf16.msra.mxu0 0
    %550 = vmatprep.subr.bf16.mxu0 0
    %551 = vmatpush1.bf16.msra.mxu0 0
    %552 = vmatprep.subr.bf16.mxu0 0
    %553 = vmatpush1.bf16.msra.mxu0 0
    %554 = vmatprep.subr.bf16.mxu0 0
    %555 = vmatpush1.bf16.msra.mxu0 0
    %556 = vmatprep.subr.bf16.mxu0 0
    %557 = vmatpush1.bf16.msra.mxu0 0
    %558 = vmatprep.subr.bf16.mxu0 0
    %559 = vmatpush1.bf16.msra.mxu0 0
    %560 = vmatprep.subr.bf16.mxu0 0
    %561 = vmatpush1.bf16.msra.mxu0 0
    %562 = vmatprep.subr.bf16.mxu0 0
    %563 = vmatpush1.bf16.msra.mxu0 0
    %564 = vmatprep.subr.bf16.mxu0 0
    %565 = vmatpush1.bf16.msra.mxu0 0
    %566 = vmatprep.subr.bf16.mxu0 0
    %567 = vmatpush1.bf16.msra.mxu0 0
    %568 = vmatprep.subr.bf16.mxu0 0
    %569 = vmatpush1.bf16.msra.mxu0 0
    %570 = vmatprep.mubr.bf16.mxu0 0
    %571 = vmatmul.mubr.bf16.gmra.mrb[0].mxu0 %v536
    %v572 = vpop.f32.mrb[0].mxu0
    %v573 = vadd.f32 %v523, %v572
    %v574 = vpop.f32.mrb[0].mxu0
    %v575 = vpop.f32.mrb[0].mxu0
    %v576 = vadd.f32 %v523, %v575
    %v577 = vpop.f32.mrb[0].mxu0
    %578 = vdwg.mxu0
    %vm579 = vcmask 31744
    %v580 = vsel %vm579, %v573, -inf
    %581 = vmax.xlane.f32.xlu0 %v580
    %v582 = vpop.xlane.xlu0 %581
    %v583 = vsel %vm579, %v576, -inf
    %584 = vmax.xlane.f32.xlu0 %v583
    %v585 = vpop.xlane.xlu0 %584
    %v586 = vsub.f32 %v573, %v582
    %v587 = vsub.f32 %v576, %v585
    %v588 = vmul.f32 %v586, 1.442695
    %v589 = vpow.pop %v588
    %v590 = vmul.f32 %v587, 1.442695
    %v591 = vpow.pop %v590
    %v592 = vsel %vm579, %v589, 0.0
    %593 = vadd.xlane.f32.xlu0 %v592
    %v594 = vpop.xlane.xlu0 %593
    %v595 = vsel %vm579, %v591, 0.0
    %596 = vadd.xlane.f32.xlu0 %v595
    %v597 = vpop.xlane.xlu0 %596
    %v598 = vrcp.pop %v594
    %v599 = vrcp.pop %v597
    %v600 = vmul.f32 %v589, %v598
    %v601 = vmul.f32 %v591, %v599
    %v602 = vmax.f32 %v456, 0.0
    %v603 = vmax.f32 %v460, 0.0
    %v604 = vpack.c.bf16 %v603, %v602
    %v605 = vld [vmem:[#allocation11] sm:$0xf]
    %v606 = vld [vmem:[#allocation11 + $0x4] sm:$0xf]
    %v607 = vld [vmem:[#allocation11 + $0x8] sm:$0xf]
    %v608 = vld [vmem:[#allocation11 + $0xc] sm:$0xf]
    %v609 = vld [vmem:[#allocation11 + $0x10] sm:$0xf]
    %v610 = vld [vmem:[#allocation11 + $0x14] sm:$0xf]
    %v611 = vld [vmem:[#allocation11 + $0x18] sm:$0xf]
    %v612 = vld [vmem:[#allocation11 + $0x1c] sm:$0xf]
    %v613 = vld [vmem:[#allocation13] sm:$0x1]
    %v615 = vlaneseq
    %v616 = vshrl.u32 %v615, 7
    %v617 = vsub.s32 0, %v616
    %v618 = vrot.slane %v613, %v617
    %v628 = vunpack.c.l.b16 %v605
    %v629 = vunpack.c.l.b16 %v606
    %v630 = vunpack.c.l.b16 %v607
    %v631 = vunpack.c.l.b16 %v608
    %v632 = vunpack.c.l.b16 %v609
    %v633 = vunpack.c.l.b16 %v610
    %v634 = vunpack.c.l.b16 %v611
    %v635 = vunpack.c.l.b16 %v612
    %v636 = vpack.c.b16 %v629, %v628
    %v637 = vpack.c.b16 %v631, %v630
    %v638 = vpack.c.b16 %v633, %v632
    %v639 = vpack.c.b16 %v635, %v634
    %vm644 = vcmask 523264
    %v646 = vsel %vm644, %v604, 0
    %648 = vmatprep.subr.bf16.mxu0 0
    %649 = vmatpush1.bf16.msra.mxu0 %v636
    %650 = vmatprep.subr.bf16.mxu0 0
    %651 = vmatpush1.bf16.msra.mxu0 %v637
    %652 = vmatprep.subr.bf16.mxu0 0
    %653 = vmatpush1.bf16.msra.mxu0 %v638
    %654 = vmatprep.subr.bf16.mxu0 0
    %655 = vmatpush1.bf16.msra.mxu0 %v639
    %656 = vmatprep.subr.bf16.mxu0 0
    %657 = vmatpush1.bf16.msra.mxu0 0
    %658 = vmatprep.subr.bf16.mxu0 0
    %659 = vmatpush1.bf16.msra.mxu0 0
    %660 = vmatprep.subr.bf16.mxu0 0
    %661 = vmatpush1.bf16.msra.mxu0 0
    %662 = vmatprep.subr.bf16.mxu0 0
    %663 = vmatpush1.bf16.msra.mxu0 0
    %664 = vmatprep.subr.bf16.mxu0 0
    %665 = vmatpush1.bf16.msra.mxu0 0
    %666 = vmatprep.subr.bf16.mxu0 0
    %667 = vmatpush1.bf16.msra.mxu0 0
    %668 = vmatprep.subr.bf16.mxu0 0
    %669 = vmatpush1.bf16.msra.mxu0 0
    %670 = vmatprep.subr.bf16.mxu0 0
    %671 = vmatpush1.bf16.msra.mxu0 0
    %672 = vmatprep.subr.bf16.mxu0 0
    %673 = vmatpush1.bf16.msra.mxu0 0
    %674 = vmatprep.subr.bf16.mxu0 0
    %675 = vmatpush1.bf16.msra.mxu0 0
    %676 = vmatprep.subr.bf16.mxu0 0
    %677 = vmatpush1.bf16.msra.mxu0 0
    %678 = vmatprep.subr.bf16.mxu0 0
    %679 = vmatpush1.bf16.msra.mxu0 0
    %680 = vmatprep.mubr.bf16.mxu0 0
    %681 = vmatmul.mubr.bf16.gmra.mrb[0].mxu0 %v646
    %v682 = vpop.f32.mrb[0].mxu0
    %v683 = vadd.f32 %v618, %v682
    %v684 = vpop.f32.mrb[0].mxu0
    %v685 = vpop.f32.mrb[0].mxu0
    %v686 = vadd.f32 %v618, %v685
    %v687 = vpop.f32.mrb[0].mxu0
    %688 = vdwg.mxu0
    %690 = vset.pattern.permute.xlu0 0
    %691 = vperm.xlu0 %690, %v600
    %v692 = vpop.permute.xlu0 %691
    %695 = vset.pattern.permute.xlu0 0
    %696 = vperm.xlu0 %695, %v601
    %v697 = vpop.permute.xlu0 %696
    %v699 = vmul.f32 %v683, %v692
    %v700 = vmul.f32 %v686, %v697
    %v701 = vmul.f32 %v456, 0.5
    %v702 = vmul.f32 %v458, 0.5
    %v703 = vmul.f32 %v460, 0.5
    %v704 = vmul.f32 %v462, 0.5
    %v705 = vmul.f32 %v456, 0.70710677
    %v706 = vmul.f32 %v458, 0.70710677
    %v707 = vmul.f32 %v460, 0.70710677
    %v708 = vmul.f32 %v462, 0.70710677
    %v709 = verf.f32.pop %v705
    %v710 = verf.f32.pop %v706
    %v711 = verf.f32.pop %v707
    %v712 = verf.f32.pop %v708
    %v713 = vadd.f32 %v709, 1.0
    %v714 = vadd.f32 %v710, 1.0
    %v715 = vadd.f32 %v711, 1.0
    %v716 = vadd.f32 %v712, 1.0
    %v717 = vmul.f32 %v701, %v713
    %v718 = vmul.f32 %v702, %v714
    %v719 = vmul.f32 %v703, %v715
    %v720 = vmul.f32 %v704, %v716
    %v721 = vpack.c.bf16 %v719, %v717
    %v722 = vpack.c.bf16 %v720, %v718
    %v723 = vld [vmem:[#allocation14] sm:$0xf]
    %v724 = vld [vmem:[#allocation14 + $0x4] sm:$0xf]
    %v725 = vld [vmem:[#allocation14 + $0x8] sm:$0xf]
    %v726 = vld [vmem:[#allocation14 + $0xc] sm:$0xf]
    %v727 = vld [vmem:[#allocation14 + $0x10] sm:$0xf]
    %v728 = vld [vmem:[#allocation14 + $0x14] sm:$0xf]
    %v729 = vld [vmem:[#allocation14 + $0x18] sm:$0xf]
    %v730 = vld [vmem:[#allocation14 + $0x1c] sm:$0xf]
    %v731 = vld [vmem:[#allocation14 + $0x20] sm:$0xf]
    %v732 = vld [vmem:[#allocation14 + $0x24] sm:$0xf]
    %v733 = vld [vmem:[#allocation14 + $0x28] sm:$0xf]
    %v734 = vld [vmem:[#allocation14 + $0x2c] sm:$0xf]
    %v735 = vld [vmem:[#allocation14 + $0x30] sm:$0xf]
    %v736 = vld [vmem:[#allocation14 + $0x34] sm:$0xf]
    %v737 = vld [vmem:[#allocation14 + $0x38] sm:$0xf]
    %v738 = vld [vmem:[#allocation14 + $0x3c] sm:$0xf]
    %v739 = vld [vmem:[#allocation16] sm:$0x1]
    %v741 = vlaneseq
    %v742 = vshrl.u32 %v741, 7
    %v743 = vsub.s32 0, %v742
    %v744 = vrot.slane %v739, %v743
    %748 = vrot.lane.b32.xlu0 %v721, 64
    %v749 = vpop.permute.xlu0 %748
    %750 = vrot.lane.b32.xlu0 %v722, 64
    %v751 = vpop.permute.xlu0 %750
    %vm752 = vcmask 523264
    %v753 = vsel %vm752, %v749, %v751
    %v771 = vunpack.c.l.b16 %v723
    %v772 = vunpack.c.l.b16 %v724
    %v773 = vunpack.c.l.b16 %v725
    %v774 = vunpack.c.l.b16 %v726
    %v775 = vunpack.c.l.b16 %v727
    %v776 = vunpack.c.l.b16 %v728
    %v777 = vunpack.c.l.b16 %v729
    %v778 = vunpack.c.l.b16 %v730
    %v779 = vunpack.c.l.b16 %v731
    %v780 = vunpack.c.l.b16 %v732
    %v781 = vunpack.c.l.b16 %v733
    %v782 = vunpack.c.l.b16 %v734
    %v783 = vunpack.c.l.b16 %v735
    %v784 = vunpack.c.l.b16 %v736
    %v785 = vunpack.c.l.b16 %v737
    %v786 = vunpack.c.l.b16 %v738
    %v787 = vpack.c.b16 %v772, %v771
    %v788 = vpack.c.b16 %v774, %v773
    %v789 = vpack.c.b16 %v776, %v775
    %v790 = vpack.c.b16 %v778, %v777
    %v791 = vpack.c.b16 %v780, %v779
    %v792 = vpack.c.b16 %v782, %v781
    %v793 = vpack.c.b16 %v784, %v783
    %v794 = vpack.c.b16 %v786, %v785
    %803 = vmatprep.subr.bf16.mxu0 0
    %804 = vmatpush1.bf16.msra.mxu0 %v787
    %805 = vmatprep.subr.bf16.mxu0 0
    %806 = vmatpush1.bf16.msra.mxu0 %v788
    %807 = vmatprep.subr.bf16.mxu0 0
    %808 = vmatpush1.bf16.msra.mxu0 %v789
    %809 = vmatprep.subr.bf16.mxu0 0
    %810 = vmatpush1.bf16.msra.mxu0 %v790
    %811 = vmatprep.subr.bf16.mxu0 0
    %812 = vmatpush1.bf16.msra.mxu0 %v791
    %813 = vmatprep.subr.bf16.mxu0 0
    %814 = vmatpush1.bf16.msra.mxu0 %v792
    %815 = vmatprep.subr.bf16.mxu0 0
    %816 = vmatpush1.bf16.msra.mxu0 %v793
    %817 = vmatprep.subr.bf16.mxu0 0
    %818 = vmatpush1.bf16.msra.mxu0 %v794
    %819 = vmatprep.subr.bf16.mxu0 0
    %820 = vmatpush1.bf16.msra.mxu0 0
    %821 = vmatprep.subr.bf16.mxu0 0
    %822 = vmatpush1.bf16.msra.mxu0 0
    %823 = vmatprep.subr.bf16.mxu0 0
    %824 = vmatpush1.bf16.msra.mxu0 0
    %825 = vmatprep.subr.bf16.mxu0 0
    %826 = vmatpush1.bf16.msra.mxu0 0
    %827 = vmatprep.subr.bf16.mxu0 0
    %828 = vmatpush1.bf16.msra.mxu0 0
    %829 = vmatprep.subr.bf16.mxu0 0
    %830 = vmatpush1.bf16.msra.mxu0 0
    %831 = vmatprep.subr.bf16.mxu0 0
    %832 = vmatpush1.bf16.msra.mxu0 0
    %833 = vmatprep.subr.bf16.mxu0 0
    %834 = vmatpush1.bf16.msra.mxu0 0
    %835 = vmatprep.mubr.bf16.mxu0 0
    %836 = vmatmul.mubr.bf16.gmra.mrb[0].mxu0 %v753
    %v837 = vpop.f32.mrb[0].mxu0
    %v838 = vadd.f32 %v744, %v837
    %v839 = vpop.f32.mrb[0].mxu0
    %v840 = vpop.f32.mrb[0].mxu0
    %v841 = vadd.f32 %v744, %v840
    %v842 = vpop.f32.mrb[0].mxu0
    %843 = vdwg.mxu0
    %844 = vset.pattern.permute.xlu0 1
    %845 = vperm.xlu0 %844, %v600
    %v846 = vpop.permute.xlu0 %845
    %848 = vset.pattern.permute.xlu0 1
    %849 = vperm.xlu0 %848, %v601
    %v850 = vpop.permute.xlu0 %849
    %v852 = vmul.f32 %v838, %v846
    %v853 = vmul.f32 %v841, %v850
    %v854 = vadd.f32 %v699, %v852
    %v855 = vadd.f32 %v700, %v853
    %v856 = vld [vmem:[#allocation17] sm:$0xf]
    %v857 = vld [vmem:[#allocation17 + $0x4] sm:$0xf]
    %v858 = vld [vmem:[#allocation17 + $0x8] sm:$0xf]
    %v859 = vld [vmem:[#allocation17 + $0xc] sm:$0xf]
    %v860 = vld [vmem:[#allocation19] sm:$0x1]
    %v862 = vlaneseq
    %v863 = vshrl.u32 %v862, 7
    %v864 = vsub.s32 0, %v863
    %v865 = vrot.slane %v860, %v864
    %v871 = vunpack.c.l.b16 %v856
    %v872 = vunpack.c.l.b16 %v857
    %v873 = vunpack.c.l.b16 %v858
    %v874 = vunpack.c.l.b16 %v859
    %v875 = vpack.c.b16 %v872, %v871
    %v876 = vpack.c.b16 %v874, %v873
    %vm879 = vcmask 261120
    %v881 = vsel %vm879, %v751, 0
    %883 = vmatprep.subr.bf16.mxu0 0
    %884 = vmatpush1.bf16.msra.mxu0 %v875
    %885 = vmatprep.subr.bf16.mxu0 0
    %886 = vmatpush1.bf16.msra.mxu0 %v876
    %887 = vmatprep.subr.bf16.mxu0 0
    %888 = vmatpush1.bf16.msra.mxu0 0
    %889 = vmatprep.subr.bf16.mxu0 0
    %890 = vmatpush1.bf16.msra.mxu0 0
    %891 = vmatprep.subr.bf16.mxu0 0
    %892 = vmatpush1.bf16.msra.mxu0 0
    %893 = vmatprep.subr.bf16.mxu0 0
    %894 = vmatpush1.bf16.msra.mxu0 0
    %895 = vmatprep.subr.bf16.mxu0 0
    %896 = vmatpush1.bf16.msra.mxu0 0
    %897 = vmatprep.subr.bf16.mxu0 0
    %898 = vmatpush1.bf16.msra.mxu0 0
    %899 = vmatprep.subr.bf16.mxu0 0
    %900 = vmatpush1.bf16.msra.mxu0 0
    %901 = vmatprep.subr.bf16.mxu0 0
    %902 = vmatpush1.bf16.msra.mxu0 0
    %903 = vmatprep.subr.bf16.mxu0 0
    %904 = vmatpush1.bf16.msra.mxu0 0
    %905 = vmatprep.subr.bf16.mxu0 0
    %906 = vmatpush1.bf16.msra.mxu0 0
    %907 = vmatprep.subr.bf16.mxu0 0
    %908 = vmatpush1.bf16.msra.mxu0 0
    %909 = vmatprep.subr.bf16.mxu0 0
    %910 = vmatpush1.bf16.msra.mxu0 0
    %911 = vmatprep.subr.bf16.mxu0 0
    %912 = vmatpush1.bf16.msra.mxu0 0
    %913 = vmatprep.subr.bf16.mxu0 0
    %914 = vmatpush1.bf16.msra.mxu0 0
    %915 = vmatprep.mubr.bf16.mxu0 0
    %916 = vmatmul.mubr.bf16.gmra.mrb[0].mxu0 %v881
    %v917 = vpop.f32.mrb[0].mxu0
    %v918 = vadd.f32 %v865, %v917
    %v919 = vpop.f32.mrb[0].mxu0
    %v920 = vpop.f32.mrb[0].mxu0
    %v921 = vadd.f32 %v865, %v920
    %v922 = vpop.f32.mrb[0].mxu0
    %923 = vdwg.mxu0
    %v924 = vmul.f32 %v918, 0.5
    %v925 = vmul.f32 %v921, 0.5
    %v926 = vmul.f32 %v918, 0.70710677
    %v927 = vmul.f32 %v921, 0.70710677
    %v928 = verf.f32.pop %v926
    %v929 = verf.f32.pop %v927
    %v930 = vadd.f32 %v928, 1.0
    %v931 = vadd.f32 %v929, 1.0
    %v932 = vmul.f32 %v924, %v930
    %v933 = vmul.f32 %v925, %v931
    %v934 = vpack.c.bf16 %v933, %v932
    %v935 = vld [vmem:[#allocation20] sm:$0xf]
    %v936 = vld [vmem:[#allocation20 + $0x4] sm:$0xf]
    %v937 = vld [vmem:[#allocation20 + $0x8] sm:$0xf]
    %v938 = vld [vmem:[#allocation20 + $0xc] sm:$0xf]
    %v939 = vld [vmem:[#allocation20 + $0x10] sm:$0xf]
    %v940 = vld [vmem:[#allocation20 + $0x14] sm:$0xf]
    %v941 = vld [vmem:[#allocation20 + $0x18] sm:$0xf]
    %v942 = vld [vmem:[#allocation20 + $0x1c] sm:$0xf]
    %v943 = vld [vmem:[#allocation20 + $0x20] sm:$0xf]
    %v944 = vld [vmem:[#allocation20 + $0x24] sm:$0xf]
    %v945 = vld [vmem:[#allocation20 + $0x28] sm:$0xf]
    %v946 = vld [vmem:[#allocation20 + $0x2c] sm:$0xf]
    %v947 = vld [vmem:[#allocation20 + $0x30] sm:$0xf]
    %v948 = vld [vmem:[#allocation20 + $0x34] sm:$0xf]
    %v949 = vld [vmem:[#allocation20 + $0x38] sm:$0xf]
    %v950 = vld [vmem:[#allocation20 + $0x3c] sm:$0xf]
    %v951 = vld [vmem:[#allocation22] sm:$0x1]
    %v953 = vlaneseq
    %v954 = vshrl.u32 %v953, 7
    %v955 = vsub.s32 0, %v954
    %v956 = vrot.slane %v951, %v955
    %v974 = vunpack.c.l.b16 %v935
    %v975 = vunpack.c.l.b16 %v936
    %v976 = vunpack.c.l.b16 %v937
    %v977 = vunpack.c.l.b16 %v938
    %v978 = vunpack.c.l.b16 %v939
    %v979 = vunpack.c.l.b16 %v940
    %v980 = vunpack.c.l.b16 %v941
    %v981 = vunpack.c.l.b16 %v942
    %v982 = vunpack.c.l.b16 %v943
    %v983 = vunpack.c.l.b16 %v944
    %v984 = vunpack.c.l.b16 %v945
    %v985 = vunpack.c.l.b16 %v946
    %v986 = vunpack.c.l.b16 %v947
    %v987 = vunpack.c.l.b16 %v948
    %v988 = vunpack.c.l.b16 %v949
    %v989 = vunpack.c.l.b16 %v950
    %v990 = vpack.c.b16 %v975, %v974
    %v991 = vpack.c.b16 %v977, %v976
    %v992 = vpack.c.b16 %v979, %v978
    %v993 = vpack.c.b16 %v981, %v980
    %v994 = vpack.c.b16 %v983, %v982
    %v995 = vpack.c.b16 %v985, %v984
    %v996 = vpack.c.b16 %v987, %v986
    %v997 = vpack.c.b16 %v989, %v988
    %1006 = vmatprep.subr.bf16.mxu0 0
    %1007 = vmatpush1.bf16.msra.mxu0 %v990
    %1008 = vmatprep.subr.bf16.mxu0 0
    %1009 = vmatpush1.bf16.msra.mxu0 %v991
    %1010 = vmatprep.subr.bf16.mxu0 0
    %1011 = vmatpush1.bf16.msra.mxu0 %v992
    %1012 = vmatprep.subr.bf16.mxu0 0
    %1013 = vmatpush1.bf16.msra.mxu0 %v993
    %1014 = vmatprep.subr.bf16.mxu0 0
    %1015 = vmatpush1.bf16.msra.mxu0 %v994
    %1016 = vmatprep.subr.bf16.mxu0 0
    %1017 = vmatpush1.bf16.msra.mxu0 %v995
    %1018 = vmatprep.subr.bf16.mxu0 0
    %1019 = vmatpush1.bf16.msra.mxu0 %v996
    %1020 = vmatprep.subr.bf16.mxu0 0
    %1021 = vmatpush1.bf16.msra.mxu0 %v997
    %1022 = vmatprep.subr.bf16.mxu0 0
    %1023 = vmatpush1.bf16.msra.mxu0 0
    %1024 = vmatprep.subr.bf16.mxu0 0
    %1025 = vmatpush1.bf16.msra.mxu0 0
    %1026 = vmatprep.subr.bf16.mxu0 0
    %1027 = vmatpush1.bf16.msra.mxu0 0
    %1028 = vmatprep.subr.bf16.mxu0 0
    %1029 = vmatpush1.bf16.msra.mxu0 0
    %1030 = vmatprep.subr.bf16.mxu0 0
    %1031 = vmatpush1.bf16.msra.mxu0 0
    %1032 = vmatprep.subr.bf16.mxu0 0
    %1033 = vmatpush1.bf16.msra.mxu0 0
    %1034 = vmatprep.subr.bf16.mxu0 0
    %1035 = vmatpush1.bf16.msra.mxu0 0
    %1036 = vmatprep.subr.bf16.mxu0 0
    %1037 = vmatpush1.bf16.msra.mxu0 0
    %1038 = vmatprep.mubr.bf16.mxu0 0
    %1039 = vmatmul.mubr.bf16.gmra.mrb[0].mxu0 %v934
    %v1040 = vpop.f32.mrb[0].mxu0
    %v1041 = vadd.f32 %v956, %v1040
    %v1042 = vpop.f32.mrb[0].mxu0
    %v1043 = vpop.f32.mrb[0].mxu0
    %v1044 = vadd.f32 %v956, %v1043
    %v1045 = vpop.f32.mrb[0].mxu0
    %1046 = vdwg.mxu0
    %1047 = vset.pattern.permute.xlu0 2
    %1048 = vperm.xlu0 %1047, %v600
    %v1049 = vpop.permute.xlu0 %1048
    %1051 = vset.pattern.permute.xlu0 2
    %1052 = vperm.xlu0 %1051, %v601
    %v1053 = vpop.permute.xlu0 %1052
    %v1055 = vmul.f32 %v1041, %v1049
    %v1056 = vmul.f32 %v1044, %v1053
    %v1057 = vadd.f32 %v854, %v1055
    %v1058 = vadd.f32 %v855, %v1056
    %v1059 = vld [vmem:[#allocation23] sm:$0xf]
    %v1060 = vld [vmem:[#allocation23 + $0x4] sm:$0xf]
    %v1061 = vld [vmem:[#allocation23 + $0x8] sm:$0xf]
    %v1062 = vld [vmem:[#allocation23 + $0xc] sm:$0xf]
    %v1063 = vld [vmem:[#allocation23 + $0x10] sm:$0xf]
    %v1064 = vld [vmem:[#allocation23 + $0x14] sm:$0xf]
    %v1065 = vld [vmem:[#allocation23 + $0x18] sm:$0xf]
    %v1066 = vld [vmem:[#allocation23 + $0x1c] sm:$0xf]
    %v1067 = vld [vmem:[#allocation23 + $0x20] sm:$0xf]
    %v1068 = vld [vmem:[#allocation23 + $0x24] sm:$0xf]
    %v1069 = vld [vmem:[#allocation23 + $0x28] sm:$0xf]
    %v1070 = vld [vmem:[#allocation23 + $0x2c] sm:$0xf]
    %v1071 = vld [vmem:[#allocation23 + $0x30] sm:$0xf]
    %v1072 = vld [vmem:[#allocation23 + $0x34] sm:$0xf]
    %v1073 = vld [vmem:[#allocation23 + $0x38] sm:$0xf]
    %v1074 = vld [vmem:[#allocation23 + $0x3c] sm:$0xf]
    %v1075 = vld [vmem:[#allocation25] sm:$0x1]
    %v1077 = vlaneseq
    %v1078 = vshrl.u32 %v1077, 7
    %v1079 = vsub.s32 0, %v1078
    %v1080 = vrot.slane %v1075, %v1079
    %1082 = vrot.lane.b32.xlu0 %v722, 32
    %v1083 = vpop.permute.xlu0 %1082
    %vm1084 = vcmask 261120
    %v1085 = vsel %vm1084, %v1083, %v527
    %v1103 = vunpack.c.l.b16 %v1059
    %v1104 = vunpack.c.l.b16 %v1060
    %v1105 = vunpack.c.l.b16 %v1061
    %v1106 = vunpack.c.l.b16 %v1062
    %v1107 = vunpack.c.l.b16 %v1063
    %v1108 = vunpack.c.l.b16 %v1064
    %v1109 = vunpack.c.l.b16 %v1065
    %v1110 = vunpack.c.l.b16 %v1066
    %v1111 = vunpack.c.l.b16 %v1067
    %v1112 = vunpack.c.l.b16 %v1068
    %v1113 = vunpack.c.l.b16 %v1069
    %v1114 = vunpack.c.l.b16 %v1070
    %v1115 = vunpack.c.l.b16 %v1071
    %v1116 = vunpack.c.l.b16 %v1072
    %v1117 = vunpack.c.l.b16 %v1073
    %v1118 = vunpack.c.l.b16 %v1074
    %v1119 = vpack.c.b16 %v1104, %v1103
    %v1120 = vpack.c.b16 %v1106, %v1105
    %v1121 = vpack.c.b16 %v1108, %v1107
    %v1122 = vpack.c.b16 %v1110, %v1109
    %v1123 = vpack.c.b16 %v1112, %v1111
    %v1124 = vpack.c.b16 %v1114, %v1113
    %v1125 = vpack.c.b16 %v1116, %v1115
    %v1126 = vpack.c.b16 %v1118, %v1117
    %1135 = vmatprep.subr.bf16.mxu0 0
    %1136 = vmatpush1.bf16.msra.mxu0 %v1119
    %1137 = vmatprep.subr.bf16.mxu0 0
    %1138 = vmatpush1.bf16.msra.mxu0 %v1120
    %1139 = vmatprep.subr.bf16.mxu0 0
    %1140 = vmatpush1.bf16.msra.mxu0 %v1121
    %1141 = vmatprep.subr.bf16.mxu0 0
    %1142 = vmatpush1.bf16.msra.mxu0 %v1122
    %1143 = vmatprep.subr.bf16.mxu0 0
    %1144 = vmatpush1.bf16.msra.mxu0 %v1123
    %1145 = vmatprep.subr.bf16.mxu0 0
    %1146 = vmatpush1.bf16.msra.mxu0 %v1124
    %1147 = vmatprep.subr.bf16.mxu0 0
    %1148 = vmatpush1.bf16.msra.mxu0 %v1125
    %1149 = vmatprep.subr.bf16.mxu0 0
    %1150 = vmatpush1.bf16.msra.mxu0 %v1126
    %1151 = vmatprep.subr.bf16.mxu0 0
    %1152 = vmatpush1.bf16.msra.mxu0 0
    %1153 = vmatprep.subr.bf16.mxu0 0
    %1154 = vmatpush1.bf16.msra.mxu0 0
    %1155 = vmatprep.subr.bf16.mxu0 0
    %1156 = vmatpush1.bf16.msra.mxu0 0
    %1157 = vmatprep.subr.bf16.mxu0 0
    %1158 = vmatpush1.bf16.msra.mxu0 0
    %1159 = vmatprep.subr.bf16.mxu0 0
    %1160 = vmatpush1.bf16.msra.mxu0 0
    %1161 = vmatprep.subr.bf16.mxu0 0
    %1162 = vmatpush1.bf16.msra.mxu0 0
    %1163 = vmatprep.subr.bf16.mxu0 0
    %1164 = vmatpush1.bf16.msra.mxu0 0
    %1165 = vmatprep.subr.bf16.mxu0 0
    %1166 = vmatpush1.bf16.msra.mxu0 0
    %1167 = vmatprep.mubr.bf16.mxu0 0
    %1168 = vmatmul.mubr.bf16.gmra.mrb[0].mxu0 %v1085
    %v1169 = vpop.f32.mrb[0].mxu0
    %v1170 = vadd.f32 %v1080, %v1169
    %v1171 = vpop.f32.mrb[0].mxu0
    %v1172 = vpop.f32.mrb[0].mxu0
    %v1173 = vadd.f32 %v1080, %v1172
    %v1174 = vpop.f32.mrb[0].mxu0
    %1175 = vdwg.mxu0
    %1176 = vset.pattern.permute.xlu0 3
    %1177 = vperm.xlu0 %1176, %v600
    %v1178 = vpop.permute.xlu0 %1177
    %1180 = vset.pattern.permute.xlu0 3
    %1181 = vperm.xlu0 %1180, %v601
    %v1182 = vpop.permute.xlu0 %1181
    %v1184 = vmul.f32 %v1170, %v1178
    %v1185 = vmul.f32 %v1173, %v1182
    %v1186 = vadd.f32 %v1057, %v1184
    %v1187 = vadd.f32 %v1058, %v1185
    %1188 = vst [vmem:[#allocation26] sm:$0xff] %v1186
    %1189 = vst [vmem:[#allocation26 + $0x8] sm:$0xff] %v1187
    // Predicated region
    $region122: #{tpu_custom_call.1} parent=1 // pred_check
      _
    $region123: #{tpu_custom_call.1} parent=1 // pred_check_branch
      %1191 = sbr.rel (0) target = $region125
    $region124: #{tpu_custom_call.1} parent=1 // pred_region
      %s1193 = ssub.s32 256, 256
      %1194 = vsyncadd [#allocation4], %s1193
      %s1195 = sshll.u32 [#allocation26], 4
      %s1196 = int_to_ptr.vmem [resolvable:$true] %s1195
      %1201 = dma.vmem_to_hbm [thread:$0]  %s1196, 256, %s15, [#allocation4], 128, 128, 8
    $region125: #{tpu_custom_call.1} parent=1 // pred_fallthru
      _
    // Predicated region
    $region126: #{tpu_custom_call.1} parent=1 // pred_check
      _
    $region127: #{tpu_custom_call.1} parent=1 // pred_check_branch
      %1203 = sbr.rel (0) target = $region129
    $region128: #{tpu_custom_call.1} parent=1 // pred_region
      %1204 = dma.done [#allocation4], 256
    $region129: #{tpu_custom_call.1} parent=1 // pred_fallthru
      _
    %1205 = vsyncpa [#allocation3], 1
    %1206 = vsyncpa [#allocation6], 1
    %1207 = vsyncpa [#allocation9], 1
    %1208 = vsyncpa [#allocation12], 1
    %1209 = vsyncpa [#allocation15], 1
    %1210 = vsyncpa [#allocation18], 1
    %1211 = vsyncpa [#allocation21], 1
    %1212 = vsyncpa [#allocation24], 1
    %1213 = vsyncpa [#allocation4], 1

</llo_original>
